<compile_context>
chip_gen: v5e
topology: v5e:2x2
jax: 0.10.0
libtpu: 0.0.40
codegen_flags: <defaults>
</compile_context>

<pallas_src>
import functools
import math

import jax
import jax.numpy as jnp
from jax import lax
from jax.experimental import pallas as pl
from jax.experimental.pallas import tpu as pltpu


# --------------------------------------------------------------------------- #
# Kernel
# --------------------------------------------------------------------------- #
def _ls_attention_kernel(x_ref, wqkv_ref, bqkv_ref, wc_ref, bc_ref, o_ref,
                         cat_ref, *, head_bounds, d_model, q_tile):
    """Fused LS attention for one batch element.

    x_ref    : (1, L, D)  input block
    wqkv_ref : (D, 3D)    [Wq*scale | Wk | Wv], bf16, (in, out) layout
    bqkv_ref : (1, 3D)    [bq*scale | bk | bv], f32
    wc_ref   : (D, D)     output projection weight, bf16
    bc_ref   : (1, D)     output projection bias, f32
    o_ref    : (1, L, D)  output block
    cat_ref  : (L, D)     bf16 VMEM scratch holding the concatenated heads
    """
    f32 = jnp.float32
    bf16 = jnp.bfloat16
    D = d_model
    x = x_ref[0]                                   # (L, D)
    L = x.shape[0]

    # One fused (L, D) @ (D, 3D) projection: bf16 operands, f32 accumulation.
    qkv = jnp.dot(x.astype(bf16), wqkv_ref[...],
                  preferred_element_type=f32) + bqkv_ref[...].astype(f32)
    qkv = qkv.astype(bf16)                         # MXU operands for attention
    q = qkv[:, :D]
    k = qkv[:, D:2 * D]
    v = qkv[:, 2 * D:]

    # Query tiling bounds the per-head f32 (q_tile, L) score/prob temporaries
    # (important for v7x's 64 MiB VMEM); K/V are computed once, above.
    for q0 in range(0, L, q_tile):
        qsz = min(q_tile, L - q0)
        qt = q[q0:q0 + qsz]                        # (qsz, D) bf16

        # Unequal per-head widths -> static, trace-time-unrolled head loop.
        for s, e in zip(head_bounds[:-1], head_bounds[1:]):
            qj = qt[:, s:e]                        # (qsz, hd) bf16
            kj = k[:, s:e]                         # (L,   hd) bf16
            vj = v[:, s:e]                         # (L,   hd) bf16

            # q_j @ k_j^T without materializing a transpose.  The 1/sqrt(hd)
            # scale is already folded into the Wq/bq columns.
            scores = lax.dot_general(
                qj, kj, dimension_numbers=(((1,), (1,)), ((), ())),
                preferred_element_type=f32)        # (qsz, L) f32

            m = jnp.max(scores, axis=-1, keepdims=True)
            p = jnp.exp(scores - m)                # unnormalized probabilities
            denom = jnp.sum(p, axis=-1, keepdims=True)

            # PV with unnormalized p, then normalize the (qsz, hd) result:
            # replaces L*L divides with qsz*hd multiplies + an EUP reciprocal.
            pv = jnp.dot(p.astype(bf16), vj, preferred_element_type=f32)
            head_out = pv * pl.reciprocal(denom, approx=True)

            cat_ref[q0:q0 + qsz, s:e] = head_out.astype(cat_ref.dtype)

    # Single full-depth output projection over the concatenated heads.
    out = jnp.dot(cat_ref[...], wc_ref[...],
                  preferred_element_type=f32) + bc_ref[...].astype(f32)
    o_ref[0] = out.astype(o_ref.dtype)


# --------------------------------------------------------------------------- #
# Wrapper
# --------------------------------------------------------------------------- #
def _pick_q_tile(L):
    """Bound the f32 (q_tile, L) score/prob temporaries to ~4 MiB each."""
    budget_rows = (4 * 1024 * 1024) // (4 * max(L, 1))
    if budget_rows >= L:
        return L
    return max(128, (budget_rows // 128) * 128)


def _vmem_limit_bytes(L, D, q_tile, x_itemsize, n_w_buf, head_bounds):
    """Recompute the VMEM budget from the real buffer sizes (+ slack)."""
    hd_max = max(e - s for s, e in zip(head_bounds[:-1], head_bounds[1:]))
    x_blocks = 2 * L * D * x_itemsize                       # double-buffered in
    o_blocks = 2 * L * D * x_itemsize                       # double-buffered out
    weights = n_w_buf * (D * 3 * D * 2 + 3 * D * 4          # wqkv + bqkv
                         + D * D * 2 + D * 4)               # wc + bc
    cat_scratch = L * D * 2                                  # bf16 concat buffer
    temps = (L * 3 * D * 4          # f32 qkv
             + L * 3 * D * 2        # bf16 qkv
             + 2 * q_tile * L * 4   # scores + p (f32)
             + q_tile * L * 2       # p bf16
             + q_tile * hd_max * 4  # pv / head_out
             + L * D * 4)           # final f32 output before cast
    est = x_blocks + o_blocks + weights + cat_scratch + temps
    # 2x slack for Mosaic relayout temps on the unaligned head slices; clamp
    # into [32 MiB, 56 MiB]: safe on v7x (64 MiB physical), above the v5e
    # 16 MiB scoped default.
    return int(min(max(2 * est, 32 * 1024 * 1024), 56 * 1024 * 1024))


def ls_attention_pallas(x, w_qkv, b_qkv, wc, bc, head_bounds, *, q_tile=None):
    """Fused LS attention: x (B, L, D) -> (B, L, D).

    w_qkv : (D, 3D) bf16  = [Wq * colscale | Wk | Wv]   (1/sqrt(hd) pre-folded)
    b_qkv : (1, 3D) f32   = [bq * colscale | bk | bv]
    wc    : (D, D)  bf16
    bc    : (1, D)  f32
    """
    B, L, D = x.shape
    head_bounds = tuple(int(b) for b in head_bounds)
    assert head_bounds[0] == 0 and head_bounds[-1] == D

    if q_tile is None:
        q_tile = _pick_q_tile(L)

    kernel = functools.partial(_ls_attention_kernel, head_bounds=head_bounds,
                               d_model=D, q_tile=q_tile)

    def _call(single_buffer_weights):
        # Weights have a constant index_map -> resident across grid steps.
        # Single-buffer them so the pipeline does not allocate 2x copies.
        wkw = ({"pipeline_mode": pl.Buffered(1)}
               if single_buffer_weights else {})
        xspec = pl.BlockSpec((1, L, D), lambda b: (b, 0, 0))
        ospec = pl.BlockSpec((1, L, D), lambda b: (b, 0, 0))
        in_specs = [
            xspec,
            pl.BlockSpec((D, 3 * D), lambda b: (0, 0), **wkw),
            pl.BlockSpec((1, 3 * D), lambda b: (0, 0), **wkw),
            pl.BlockSpec((D, D), lambda b: (0, 0), **wkw),
            pl.BlockSpec((1, D), lambda b: (0, 0), **wkw),
        ]
        n_w_buf = 1 if single_buffer_weights else 2
        vmem_limit = _vmem_limit_bytes(L, D, q_tile, x.dtype.itemsize,
                                       n_w_buf, head_bounds)
        return pl.pallas_call(
            kernel,
            out_shape=jax.ShapeDtypeStruct((B, L, D), x.dtype),
            grid_spec=pltpu.PrefetchScalarGridSpec(
                num_scalar_prefetch=0,
                grid=(B,),
                in_specs=in_specs,
                out_specs=ospec,
                scratch_shapes=[pltpu.VMEM((L, D), jnp.bfloat16)],
            ),
            compiler_params=pltpu.CompilerParams(
                dimension_semantics=("parallel",),
                vmem_limit_bytes=vmem_limit,
            ),
        )(x, w_qkv, b_qkv, wc, bc)

    try:
        return _call(True)
    except Exception:
        # pl.Buffered(1) (single-buffered resident weights) not accepted by
        # this jax version -> fall back to default double-buffered specs.
        return _call(False)


# --------------------------------------------------------------------------- #
# Module
# --------------------------------------------------------------------------- #
def _ls_head_bounds(d_model, n_head):
    """Replicates the hd_list construction of the PyTorch module."""
    hd = [2 ** (1 - math.ceil(4 * (i + 1) / n_head)) *
          (d_model / 2 ** (math.log2(n_head) - 1)) for i in range(n_head - 1)]
    hd.append((n_head * d_model + 4 * d_model) / (16 * n_head))
    bounds = [0.0]
    for h in hd:
        bounds.append(bounds[-1] + h)
    assert abs(bounds[-1] - d_model) < 1e-6, "head widths must sum to d_model"
    for b in bounds:
        assert abs(b - round(b)) < 1e-6, "head boundaries must be integers"
    return tuple(int(round(b)) for b in bounds)


class LSAttentionPallas:
    """JAX/Pallas equivalent of the PyTorch LS_Attention module (forward only)."""

    def __init__(self, d_model, n_head, dim_head=64, dropout=0.0, *, key):
        del dim_head, dropout  # unused by the PyTorch forward path as well
        self.d_model = d_model
        self.n_head = n_head
        self.head_bounds = _ls_head_bounds(d_model, n_head)

        ks = jax.random.split(key, 8)
        scale = 0.05
        f32 = jnp.float32
        # (in, out) layout: y = x @ W + b   (== torch Linear with W_torch = W.T)
        self.wq = scale * jax.random.normal(ks[0], (d_model, d_model), f32)
        self.bq = scale * jax.random.normal(ks[1], (1, d_model), f32)
        self.wk = scale * jax.random.normal(ks[2], (d_model, d_model), f32)
        self.bk = scale * jax.random.normal(ks[3], (1, d_model), f32)
        self.wv = scale * jax.random.normal(ks[4], (d_model, d_model), f32)
        self.bv = scale * jax.random.normal(ks[5], (1, d_model), f32)
        self.wc = scale * jax.random.normal(ks[6], (d_model, d_model), f32)
        self.bc = scale * jax.random.normal(ks[7], (1, d_model), f32)

        # --- kernel-ready params (built once at init) ---------------------
        # Fold the per-head 1/sqrt(hd_j) scale into the Wq/bq columns, fuse
        # Wq/Wk/Wv into one (D, 3D) weight, and ship weights as bf16.
        cs = []
        for s, e in zip(self.head_bounds[:-1], self.head_bounds[1:]):
            cs.extend([1.0 / math.sqrt(e - s)] * (e - s))
        col_scale = jnp.asarray(cs, f32)[None, :]          # (1, D)
        self.w_qkv = jnp.concatenate(
            [self.wq * col_scale, self.wk, self.wv], axis=1).astype(jnp.bfloat16)
        self.b_qkv = jnp.concatenate(
            [self.bq * col_scale, self.bk, self.bv], axis=1).astype(f32)
        self.wc_b16 = self.wc.astype(jnp.bfloat16)

    def __call__(self, x, mask=None):
        # TODO(synk): additive attention mask path not implemented (mask=None only).
        assert mask is None, "mask is not supported by this Pallas kernel"
        return ls_attention_pallas(x, self.w_qkv, self.b_qkv, self.wc_b16,
                                   self.bc, self.head_bounds)


# --------------------------------------------------------------------------- #
# Pure-JAX reference (uses the raw, un-fused f32 weights)
# --------------------------------------------------------------------------- #
def _reference(x, m):
    hi = lax.Precision.HIGHEST
    q = jnp.einsum("bld,de->ble", x, m.wq, precision=hi) + m.bq[0]
    k = jnp.einsum("bld,de->ble", x, m.wk, precision=hi) + m.bk[0]
    v = jnp.einsum("bld,de->ble", x, m.wv, precision=hi) + m.bv[0]
    outs = []
    for s, e in zip(m.head_bounds[:-1], m.head_bounds[1:]):
        hd = e - s
        qj, kj, vj = q[..., s:e], k[..., s:e], v[..., s:e]
        sc = jnp.einsum("bqd,bkd->bqk", qj, kj, precision=hi) / math.sqrt(hd)
        attn = jax.nn.softmax(sc, axis=-1)
        outs.append(jnp.einsum("bqk,bkd->bqd", attn, vj, precision=hi))
    cat = jnp.concatenate(outs, axis=-1)
    return jnp.einsum("bld,de->ble", cat, m.wc, precision=hi) + m.bc[0]


if __name__ == "__main__":
    key = jax.random.PRNGKey(0)
    kx, kp = jax.random.split(key)

    # Small but representative shapes: (n_head=4, d_model=64) gives the
    # unequal LS head widths [32, 16, 8, 8].
    B, L, d_model, n_head = 2, 8, 64, 4
    x = jax.random.normal(kx, (B, L, d_model), jnp.float32)

    module = LSAttentionPallas(d_model, n_head, key=kp)
    out = jax.block_until_ready(module(x))

    ref = _reference(x, module)
    assert out.shape == (B, L, d_model)
    err = float(jnp.max(jnp.abs(out - ref)))
    # bf16 MXU operands + approx reciprocal vs HIGHEST-precision f32 reference.
    assert err < 2e-2, f"max abs error {err}"

    print("KERNEL_OK")
</pallas_src>

<mosaic_0001>
module attributes {stable_mosaic.version = 11 : i64} {
  func.func @_ls_attention_kernel(%arg0: i32, %arg1: memref<1x8x64xf32, #tpu.memory_space<vmem>>, %arg2: memref<64x192xbf16, #tpu.memory_space<vmem>>, %arg3: memref<1x192xf32, #tpu.memory_space<vmem>>, %arg4: memref<64x64xbf16, #tpu.memory_space<vmem>>, %arg5: memref<1x64xf32, #tpu.memory_space<vmem>>, %arg6: memref<1x8x64xf32, #tpu.memory_space<vmem>>, %arg7: memref<8x64xbf16, #tpu.memory_space<vmem>>) attributes {dimension_semantics = [#tpu.dimension_semantics<parallel>], iteration_bounds = array<i64: 2>, scalar_prefetch = 0 : i64, scratch_operands = 1 : i64, tpu.core_type = #tpu.core_type<tc>, window_params = [{transform_indices = @transform_0, window_bounds = array<i64: 1, 8, 64>}, {pipeline_mode = #tpu.pipeline_mode<synchronous>, transform_indices = @transform_1, window_bounds = array<i64: 64, 192>}, {pipeline_mode = #tpu.pipeline_mode<synchronous>, transform_indices = @transform_2, window_bounds = array<i64: 1, 192>}, {pipeline_mode = #tpu.pipeline_mode<synchronous>, transform_indices = @transform_3, window_bounds = array<i64: 64, 64>}, {pipeline_mode = #tpu.pipeline_mode<synchronous>, transform_indices = @transform_4, window_bounds = array<i64: 1, 64>}, {transform_indices = @transform_5, window_bounds = array<i64: 1, 8, 64>}]} {
    %c0 = arith.constant 0 : index
    %c0_0 = arith.constant 0 : index
    %c0_1 = arith.constant 0 : index
    %0 = vector.load %arg1[%c0, %c0_0, %c0_1] : memref<1x8x64xf32, #tpu.memory_space<vmem>>, vector<1x8x64xf32>
    %1 = vector.shape_cast %0 : vector<1x8x64xf32> to vector<8x64xf32>
    %2 = arith.truncf %1 : vector<8x64xf32> to vector<8x64xbf16>
    %c0_2 = arith.constant 0 : index
    %c0_3 = arith.constant 0 : index
    %3 = vector.load %arg2[%c0_2, %c0_3] : memref<64x192xbf16, #tpu.memory_space<vmem>>, vector<64x192xbf16>
    %cst = arith.constant dense<0.000000e+00> : vector<8x192xf32>
    %4 = tpu.matmul %2, %3, %cst {dimension_numbers = #tpu.dot_dimension_numbers<[1], [0], [0], [1], [0, 0, 1, 1], [], []>} : vector<8x64xbf16>, vector<64x192xbf16>, vector<8x192xf32> -> vector<8x192xf32>
    %c0_4 = arith.constant 0 : index
    %c0_5 = arith.constant 0 : index
    %5 = vector.load %arg3[%c0_4, %c0_5] : memref<1x192xf32, #tpu.memory_space<vmem>>, vector<1x192xf32>
    %6 = vector.broadcast %5 : vector<1x192xf32> to vector<8x192xf32>
    %7 = arith.addf %4, %6 : vector<8x192xf32>
    %8 = arith.truncf %7 : vector<8x192xf32> to vector<8x192xbf16>
    %9 = vector.extract_strided_slice %8 {offsets = [0, 0], sizes = [8, 64], strides = [1, 1]} : vector<8x192xbf16> to vector<8x64xbf16>
    %10 = vector.extract_strided_slice %8 {offsets = [0, 64], sizes = [8, 64], strides = [1, 1]} : vector<8x192xbf16> to vector<8x64xbf16>
    %11 = vector.extract_strided_slice %8 {offsets = [0, 128], sizes = [8, 64], strides = [1, 1]} : vector<8x192xbf16> to vector<8x64xbf16>
    %12 = vector.extract_strided_slice %9 {offsets = [0, 0], sizes = [8, 32], strides = [1, 1]} : vector<8x64xbf16> to vector<8x32xbf16>
    %13 = vector.extract_strided_slice %10 {offsets = [0, 0], sizes = [8, 32], strides = [1, 1]} : vector<8x64xbf16> to vector<8x32xbf16>
    %14 = vector.extract_strided_slice %11 {offsets = [0, 0], sizes = [8, 32], strides = [1, 1]} : vector<8x64xbf16> to vector<8x32xbf16>
    %cst_6 = arith.constant dense<0.000000e+00> : vector<8x8xf32>
    %15 = tpu.matmul %12, %13, %cst_6 {dimension_numbers = #tpu.dot_dimension_numbers<[1], [1], [0], [0], [0, 0, 1, 0], [], []>} : vector<8x32xbf16>, vector<8x32xbf16>, vector<8x8xf32> -> vector<8x8xf32>
    %cst_7 = arith.constant dense<0xFF800000> : vector<8xf32>
    %16 = vector.multi_reduction <maximumf>, %15, %cst_7 [1] : vector<8x8xf32> to vector<8xf32>
    %17 = vector.shape_cast %16 : vector<8xf32> to vector<8x1xf32>
    %18 = vector.broadcast %17 : vector<8x1xf32> to vector<8x8xf32>
    %19 = arith.subf %15, %18 : vector<8x8xf32>
    %20 = math.exp %19 : vector<8x8xf32>
    %cst_8 = arith.constant dense<0.000000e+00> : vector<8xf32>
    %21 = vector.multi_reduction <add>, %20, %cst_8 [1] : vector<8x8xf32> to vector<8xf32>
    %22 = vector.shape_cast %21 : vector<8xf32> to vector<8x1xf32>
    %23 = arith.truncf %20 : vector<8x8xf32> to vector<8x8xbf16>
    %cst_9 = arith.constant dense<0.000000e+00> : vector<8x32xf32>
    %24 = tpu.matmul %23, %14, %cst_9 {dimension_numbers = #tpu.dot_dimension_numbers<[1], [0], [0], [1], [0, 0, 1, 1], [], []>} : vector<8x8xbf16>, vector<8x32xbf16>, vector<8x32xf32> -> vector<8x32xf32>
    %25 = tpu.reciprocal %22 {approx = true} : vector<8x1xf32> -> vector<8x1xf32>
    %26 = vector.broadcast %25 : vector<8x1xf32> to vector<8x32xf32>
    %27 = arith.mulf %24, %26 : vector<8x32xf32>
    %28 = arith.truncf %27 : vector<8x32xf32> to vector<8x32xbf16>
    %c0_10 = arith.constant 0 : index
    %c0_11 = arith.constant 0 : index
    %29 = vector.load %arg7[%c0_10, %c0_11] : memref<8x64xbf16, #tpu.memory_space<vmem>>, vector<8x32xbf16>
    tpu.vector_store %arg7[%c0_10, %c0_11], %28 {strides = array<i32>} : memref<8x64xbf16, #tpu.memory_space<vmem>>, vector<8x32xbf16>,
    %30 = vector.extract_strided_slice %9 {offsets = [0, 32], sizes = [8, 16], strides = [1, 1]} : vector<8x64xbf16> to vector<8x16xbf16>
    %31 = vector.extract_strided_slice %10 {offsets = [0, 32], sizes = [8, 16], strides = [1, 1]} : vector<8x64xbf16> to vector<8x16xbf16>
    %32 = vector.extract_strided_slice %11 {offsets = [0, 32], sizes = [8, 16], strides = [1, 1]} : vector<8x64xbf16> to vector<8x16xbf16>
    %cst_12 = arith.constant dense<0.000000e+00> : vector<8x8xf32>
    %33 = tpu.matmul %30, %31, %cst_12 {dimension_numbers = #tpu.dot_dimension_numbers<[1], [1], [0], [0], [0, 0, 1, 0], [], []>} : vector<8x16xbf16>, vector<8x16xbf16>, vector<8x8xf32> -> vector<8x8xf32>
    %cst_13 = arith.constant dense<0xFF800000> : vector<8xf32>
    %34 = vector.multi_reduction <maximumf>, %33, %cst_13 [1] : vector<8x8xf32> to vector<8xf32>
    %35 = vector.shape_cast %34 : vector<8xf32> to vector<8x1xf32>
    %36 = vector.broadcast %35 : vector<8x1xf32> to vector<8x8xf32>
    %37 = arith.subf %33, %36 : vector<8x8xf32>
    %38 = math.exp %37 : vector<8x8xf32>
    %cst_14 = arith.constant dense<0.000000e+00> : vector<8xf32>
    %39 = vector.multi_reduction <add>, %38, %cst_14 [1] : vector<8x8xf32> to vector<8xf32>
    %40 = vector.shape_cast %39 : vector<8xf32> to vector<8x1xf32>
    %41 = arith.truncf %38 : vector<8x8xf32> to vector<8x8xbf16>
    %cst_15 = arith.constant dense<0.000000e+00> : vector<8x16xf32>
    %42 = tpu.matmul %41, %32, %cst_15 {dimension_numbers = #tpu.dot_dimension_numbers<[1], [0], [0], [1], [0, 0, 1, 1], [], []>} : vector<8x8xbf16>, vector<8x16xbf16>, vector<8x16xf32> -> vector<8x16xf32>
    %43 = tpu.reciprocal %40 {approx = true} : vector<8x1xf32> -> vector<8x1xf32>
    %44 = vector.broadcast %43 : vector<8x1xf32> to vector<8x16xf32>
    %45 = arith.mulf %42, %44 : vector<8x16xf32>
    %46 = arith.truncf %45 : vector<8x16xf32> to vector<8x16xbf16>
    %c0_16 = arith.constant 0 : index
    %c32 = arith.constant 32 : index
    %47 = vector.load %arg7[%c0_16, %c32] : memref<8x64xbf16, #tpu.memory_space<vmem>>, vector<8x16xbf16>
    tpu.vector_store %arg7[%c0_16, %c32], %46 {strides = array<i32>} : memref<8x64xbf16, #tpu.memory_space<vmem>>, vector<8x16xbf16>,
    %48 = vector.extract_strided_slice %9 {offsets = [0, 48], sizes = [8, 8], strides = [1, 1]} : vector<8x64xbf16> to vector<8x8xbf16>
    %49 = vector.extract_strided_slice %10 {offsets = [0, 48], sizes = [8, 8], strides = [1, 1]} : vector<8x64xbf16> to vector<8x8xbf16>
    %50 = vector.extract_strided_slice %11 {offsets = [0, 48], sizes = [8, 8], strides = [1, 1]} : vector<8x64xbf16> to vector<8x8xbf16>
    %cst_17 = arith.constant dense<0.000000e+00> : vector<8x8xf32>
    %51 = tpu.matmul %48, %49, %cst_17 {dimension_numbers = #tpu.dot_dimension_numbers<[1], [1], [0], [0], [0, 0, 1, 0], [], []>} : vector<8x8xbf16>, vector<8x8xbf16>, vector<8x8xf32> -> vector<8x8xf32>
    %cst_18 = arith.constant dense<0xFF800000> : vector<8xf32>
    %52 = vector.multi_reduction <maximumf>, %51, %cst_18 [1] : vector<8x8xf32> to vector<8xf32>
    %53 = vector.shape_cast %52 : vector<8xf32> to vector<8x1xf32>
    %54 = vector.broadcast %53 : vector<8x1xf32> to vector<8x8xf32>
    %55 = arith.subf %51, %54 : vector<8x8xf32>
    %56 = math.exp %55 : vector<8x8xf32>
    %cst_19 = arith.constant dense<0.000000e+00> : vector<8xf32>
    %57 = vector.multi_reduction <add>, %56, %cst_19 [1] : vector<8x8xf32> to vector<8xf32>
    %58 = vector.shape_cast %57 : vector<8xf32> to vector<8x1xf32>
    %59 = arith.truncf %56 : vector<8x8xf32> to vector<8x8xbf16>
    %cst_20 = arith.constant dense<0.000000e+00> : vector<8x8xf32>
    %60 = tpu.matmul %59, %50, %cst_20 {dimension_numbers = #tpu.dot_dimension_numbers<[1], [0], [0], [1], [0, 0, 1, 1], [], []>} : vector<8x8xbf16>, vector<8x8xbf16>, vector<8x8xf32> -> vector<8x8xf32>
    %61 = tpu.reciprocal %58 {approx = true} : vector<8x1xf32> -> vector<8x1xf32>
    %62 = vector.broadcast %61 : vector<8x1xf32> to vector<8x8xf32>
    %63 = arith.mulf %60, %62 : vector<8x8xf32>
    %64 = arith.truncf %63 : vector<8x8xf32> to vector<8x8xbf16>
    %c0_21 = arith.constant 0 : index
    %c48 = arith.constant 48 : index
    %65 = vector.load %arg7[%c0_21, %c48] : memref<8x64xbf16, #tpu.memory_space<vmem>>, vector<8x8xbf16>
    tpu.vector_store %arg7[%c0_21, %c48], %64 {strides = array<i32>} : memref<8x64xbf16, #tpu.memory_space<vmem>>, vector<8x8xbf16>,
    %66 = vector.extract_strided_slice %9 {offsets = [0, 56], sizes = [8, 8], strides = [1, 1]} : vector<8x64xbf16> to vector<8x8xbf16>
    %67 = vector.extract_strided_slice %10 {offsets = [0, 56], sizes = [8, 8], strides = [1, 1]} : vector<8x64xbf16> to vector<8x8xbf16>
    %68 = vector.extract_strided_slice %11 {offsets = [0, 56], sizes = [8, 8], strides = [1, 1]} : vector<8x64xbf16> to vector<8x8xbf16>
    %cst_22 = arith.constant dense<0.000000e+00> : vector<8x8xf32>
    %69 = tpu.matmul %66, %67, %cst_22 {dimension_numbers = #tpu.dot_dimension_numbers<[1], [1], [0], [0], [0, 0, 1, 0], [], []>} : vector<8x8xbf16>, vector<8x8xbf16>, vector<8x8xf32> -> vector<8x8xf32>
    %cst_23 = arith.constant dense<0xFF800000> : vector<8xf32>
    %70 = vector.multi_reduction <maximumf>, %69, %cst_23 [1] : vector<8x8xf32> to vector<8xf32>
    %71 = vector.shape_cast %70 : vector<8xf32> to vector<8x1xf32>
    %72 = vector.broadcast %71 : vector<8x1xf32> to vector<8x8xf32>
    %73 = arith.subf %69, %72 : vector<8x8xf32>
    %74 = math.exp %73 : vector<8x8xf32>
    %cst_24 = arith.constant dense<0.000000e+00> : vector<8xf32>
    %75 = vector.multi_reduction <add>, %74, %cst_24 [1] : vector<8x8xf32> to vector<8xf32>
    %76 = vector.shape_cast %75 : vector<8xf32> to vector<8x1xf32>
    %77 = arith.truncf %74 : vector<8x8xf32> to vector<8x8xbf16>
    %cst_25 = arith.constant dense<0.000000e+00> : vector<8x8xf32>
    %78 = tpu.matmul %77, %68, %cst_25 {dimension_numbers = #tpu.dot_dimension_numbers<[1], [0], [0], [1], [0, 0, 1, 1], [], []>} : vector<8x8xbf16>, vector<8x8xbf16>, vector<8x8xf32> -> vector<8x8xf32>
    %79 = tpu.reciprocal %76 {approx = true} : vector<8x1xf32> -> vector<8x1xf32>
    %80 = vector.broadcast %79 : vector<8x1xf32> to vector<8x8xf32>
    %81 = arith.mulf %78, %80 : vector<8x8xf32>
    %82 = arith.truncf %81 : vector<8x8xf32> to vector<8x8xbf16>
    %c0_26 = arith.constant 0 : index
    %c56 = arith.constant 56 : index
    %83 = vector.load %arg7[%c0_26, %c56] : memref<8x64xbf16, #tpu.memory_space<vmem>>, vector<8x8xbf16>
    tpu.vector_store %arg7[%c0_26, %c56], %82 {strides = array<i32>} : memref<8x64xbf16, #tpu.memory_space<vmem>>, vector<8x8xbf16>,
    %c0_27 = arith.constant 0 : index
    %c0_28 = arith.constant 0 : index
    %84 = vector.load %arg7[%c0_27, %c0_28] : memref<8x64xbf16, #tpu.memory_space<vmem>>, vector<8x64xbf16>
    %c0_29 = arith.constant 0 : index
    %c0_30 = arith.constant 0 : index
    %85 = vector.load %arg4[%c0_29, %c0_30] : memref<64x64xbf16, #tpu.memory_space<vmem>>, vector<64x64xbf16>
    %cst_31 = arith.constant dense<0.000000e+00> : vector<8x64xf32>
    %86 = tpu.matmul %84, %85, %cst_31 {dimension_numbers = #tpu.dot_dimension_numbers<[1], [0], [0], [1], [0, 0, 1, 1], [], []>} : vector<8x64xbf16>, vector<64x64xbf16>, vector<8x64xf32> -> vector<8x64xf32>
    %c0_32 = arith.constant 0 : index
    %c0_33 = arith.constant 0 : index
    %87 = vector.load %arg5[%c0_32, %c0_33] : memref<1x64xf32, #tpu.memory_space<vmem>>, vector<1x64xf32>
    %88 = vector.broadcast %87 : vector<1x64xf32> to vector<8x64xf32>
    %89 = arith.addf %86, %88 : vector<8x64xf32>
    %c0_34 = arith.constant 0 : index
    %c0_35 = arith.constant 0 : index
    %c0_36 = arith.constant 0 : index
    %90 = vector.load %arg6[%c0_34, %c0_35, %c0_36] : memref<1x8x64xf32, #tpu.memory_space<vmem>>, vector<1x8x64xf32>
    %91 = vector.shape_cast %90 : vector<1x8x64xf32> to vector<8x64xf32>
    %92 = vector.shape_cast %89 : vector<8x64xf32> to vector<1x8x64xf32>
    tpu.vector_store %arg6[%c0_34, %c0_35, %c0_36], %92 {strides = array<i32>} : memref<1x8x64xf32, #tpu.memory_space<vmem>>, vector<1x8x64xf32>,
    return
  }
  func.func @transform_0(%arg0: i32) -> (i32, i32, i32) {
    %c0_i32 = arith.constant 0 : i32
    %c0_i32_0 = arith.constant 0 : i32
    %c0_i32_1 = arith.constant 0 : i32
    return %arg0, %c0_i32, %c0_i32_0 : i32, i32, i32
  }
  func.func @transform_1(%arg0: i32) -> (i32, i32) {
    %c0_i32 = arith.constant 0 : i32
    %c0_i32_0 = arith.constant 0 : i32
    %c0_i32_1 = arith.constant 0 : i32
    return %c0_i32, %c0_i32_0 : i32, i32
  }
  func.func @transform_2(%arg0: i32) -> (i32, i32) {
    %c0_i32 = arith.constant 0 : i32
    %c0_i32_0 = arith.constant 0 : i32
    %c0_i32_1 = arith.constant 0 : i32
    return %c0_i32, %c0_i32_0 : i32, i32
  }
  func.func @transform_3(%arg0: i32) -> (i32, i32) {
    %c0_i32 = arith.constant 0 : i32
    %c0_i32_0 = arith.constant 0 : i32
    %c0_i32_1 = arith.constant 0 : i32
    return %c0_i32, %c0_i32_0 : i32, i32
  }
  func.func @transform_4(%arg0: i32) -> (i32, i32) {
    %c0_i32 = arith.constant 0 : i32
    %c0_i32_0 = arith.constant 0 : i32
    %c0_i32_1 = arith.constant 0 : i32
    return %c0_i32, %c0_i32_0 : i32, i32
  }
  func.func @transform_5(%arg0: i32) -> (i32, i32, i32) {
    %c0_i32 = arith.constant 0 : i32
    %c0_i32_0 = arith.constant 0 : i32
    %c0_i32_1 = arith.constant 0 : i32
    return %arg0, %c0_i32, %c0_i32_0 : i32, i32, i32
  }
}

module attributes {stable_mosaic.version = 11 : i64} {
  func.func @_ls_attention_kernel(%arg0: i32, %arg1: memref<1x8x64xf32, #tpu.memory_space<vmem>>, %arg2: memref<64x192xbf16, #tpu.memory_space<vmem>>, %arg3: memref<1x192xf32, #tpu.memory_space<vmem>>, %arg4: memref<64x64xbf16, #tpu.memory_space<vmem>>, %arg5: memref<1x64xf32, #tpu.memory_space<vmem>>, %arg6: memref<1x8x64xf32, #tpu.memory_space<vmem>>, %arg7: memref<8x64xbf16, #tpu.memory_space<vmem>>) attributes {dimension_semantics = [#tpu.dimension_semantics<parallel>], iteration_bounds = array<i64: 2>, scalar_prefetch = 0 : i64, scratch_operands = 1 : i64, tpu.core_type = #tpu.core_type<tc>, window_params = [{transform_indices = @transform_0, window_bounds = array<i64: 1, 8, 64>}, {pipeline_mode = #tpu.pipeline_mode<synchronous>, transform_indices = @transform_1, window_bounds = array<i64: 64, 192>}, {pipeline_mode = #tpu.pipeline_mode<synchronous>, transform_indices = @transform_2, window_bounds = array<i64: 1, 192>}, {pipeline_mode = #tpu.pipeline_mode<synchronous>, transform_indices = @transform_3, window_bounds = array<i64: 64, 64>}, {pipeline_mode = #tpu.pipeline_mode<synchronous>, transform_indices = @transform_4, window_bounds = array<i64: 1, 64>}, {transform_indices = @transform_5, window_bounds = array<i64: 1, 8, 64>}]} {
    %c0 = arith.constant 0 : index
    %c0_0 = arith.constant 0 : index
    %c0_1 = arith.constant 0 : index
    %0 = vector.load %arg1[%c0, %c0_0, %c0_1] : memref<1x8x64xf32, #tpu.memory_space<vmem>>, vector<1x8x64xf32>
    %1 = vector.shape_cast %0 : vector<1x8x64xf32> to vector<8x64xf32>
    %2 = arith.truncf %1 : vector<8x64xf32> to vector<8x64xbf16>
    %c0_2 = arith.constant 0 : index
    %c0_3 = arith.constant 0 : index
    %3 = vector.load %arg2[%c0_2, %c0_3] : memref<64x192xbf16, #tpu.memory_space<vmem>>, vector<64x192xbf16>
    %cst = arith.constant dense<0.000000e+00> : vector<8x192xf32>
    %4 = tpu.matmul %2, %3, %cst {dimension_numbers = #tpu.dot_dimension_numbers<[1], [0], [0], [1], [0, 0, 1, 1], [], []>} : vector<8x64xbf16>, vector<64x192xbf16>, vector<8x192xf32> -> vector<8x192xf32>
    %c0_4 = arith.constant 0 : index
    %c0_5 = arith.constant 0 : index
    %5 = vector.load %arg3[%c0_4, %c0_5] : memref<1x192xf32, #tpu.memory_space<vmem>>, vector<1x192xf32>
    %6 = vector.broadcast %5 : vector<1x192xf32> to vector<8x192xf32>
    %7 = arith.addf %4, %6 : vector<8x192xf32>
    %8 = arith.truncf %7 : vector<8x192xf32> to vector<8x192xbf16>
    %9 = vector.extract_strided_slice %8 {offsets = [0, 0], sizes = [8, 64], strides = [1, 1]} : vector<8x192xbf16> to vector<8x64xbf16>
    %10 = vector.extract_strided_slice %8 {offsets = [0, 64], sizes = [8, 64], strides = [1, 1]} : vector<8x192xbf16> to vector<8x64xbf16>
    %11 = vector.extract_strided_slice %8 {offsets = [0, 128], sizes = [8, 64], strides = [1, 1]} : vector<8x192xbf16> to vector<8x64xbf16>
    %12 = vector.extract_strided_slice %9 {offsets = [0, 0], sizes = [8, 32], strides = [1, 1]} : vector<8x64xbf16> to vector<8x32xbf16>
    %13 = vector.extract_strided_slice %10 {offsets = [0, 0], sizes = [8, 32], strides = [1, 1]} : vector<8x64xbf16> to vector<8x32xbf16>
    %14 = vector.extract_strided_slice %11 {offsets = [0, 0], sizes = [8, 32], strides = [1, 1]} : vector<8x64xbf16> to vector<8x32xbf16>
    %cst_6 = arith.constant dense<0.000000e+00> : vector<8x8xf32>
    %15 = tpu.matmul %12, %13, %cst_6 {dimension_numbers = #tpu.dot_dimension_numbers<[1], [1], [0], [0], [0, 0, 1, 0], [], []>} : vector<8x32xbf16>, vector<8x32xbf16>, vector<8x8xf32> -> vector<8x8xf32>
    %cst_7 = arith.constant dense<0xFF800000> : vector<8xf32>
    %16 = vector.multi_reduction <maximumf>, %15, %cst_7 [1] : vector<8x8xf32> to vector<8xf32>
    %17 = vector.shape_cast %16 : vector<8xf32> to vector<8x1xf32>
    %18 = vector.broadcast %17 : vector<8x1xf32> to vector<8x8xf32>
    %19 = arith.subf %15, %18 : vector<8x8xf32>
    %20 = math.exp %19 : vector<8x8xf32>
    %cst_8 = arith.constant dense<0.000000e+00> : vector<8xf32>
    %21 = vector.multi_reduction <add>, %20, %cst_8 [1] : vector<8x8xf32> to vector<8xf32>
    %22 = vector.shape_cast %21 : vector<8xf32> to vector<8x1xf32>
    %23 = arith.truncf %20 : vector<8x8xf32> to vector<8x8xbf16>
    %cst_9 = arith.constant dense<0.000000e+00> : vector<8x32xf32>
    %24 = tpu.matmul %23, %14, %cst_9 {dimension_numbers = #tpu.dot_dimension_numbers<[1], [0], [0], [1], [0, 0, 1, 1], [], []>} : vector<8x8xbf16>, vector<8x32xbf16>, vector<8x32xf32> -> vector<8x32xf32>
    %25 = tpu.reciprocal %22 {approx = true} : vector<8x1xf32> -> vector<8x1xf32>
    %26 = vector.broadcast %25 : vector<8x1xf32> to vector<8x32xf32>
    %27 = arith.mulf %24, %26 : vector<8x32xf32>
    %28 = arith.truncf %27 : vector<8x32xf32> to vector<8x32xbf16>
    %c0_10 = arith.constant 0 : index
    %c0_11 = arith.constant 0 : index
    %29 = vector.load %arg7[%c0_10, %c0_11] : memref<8x64xbf16, #tpu.memory_space<vmem>>, vector<8x32xbf16>
    tpu.vector_store %arg7[%c0_10, %c0_11], %28 {strides = array<i32>} : memref<8x64xbf16, #tpu.memory_space<vmem>>, vector<8x32xbf16>,
    %30 = vector.extract_strided_slice %9 {offsets = [0, 32], sizes = [8, 16], strides = [1, 1]} : vector<8x64xbf16> to vector<8x16xbf16>
    %31 = vector.extract_strided_slice %10 {offsets = [0, 32], sizes = [8, 16], strides = [1, 1]} : vector<8x64xbf16> to vector<8x16xbf16>
    %32 = vector.extract_strided_slice %11 {offsets = [0, 32], sizes = [8, 16], strides = [1, 1]} : vector<8x64xbf16> to vector<8x16xbf16>
    %cst_12 = arith.constant dense<0.000000e+00> : vector<8x8xf32>
    %33 = tpu.matmul %30, %31, %cst_12 {dimension_numbers = #tpu.dot_dimension_numbers<[1], [1], [0], [0], [0, 0, 1, 0], [], []>} : vector<8x16xbf16>, vector<8x16xbf16>, vector<8x8xf32> -> vector<8x8xf32>
    %cst_13 = arith.constant dense<0xFF800000> : vector<8xf32>
    %34 = vector.multi_reduction <maximumf>, %33, %cst_13 [1] : vector<8x8xf32> to vector<8xf32>
    %35 = vector.shape_cast %34 : vector<8xf32> to vector<8x1xf32>
    %36 = vector.broadcast %35 : vector<8x1xf32> to vector<8x8xf32>
    %37 = arith.subf %33, %36 : vector<8x8xf32>
    %38 = math.exp %37 : vector<8x8xf32>
    %cst_14 = arith.constant dense<0.000000e+00> : vector<8xf32>
    %39 = vector.multi_reduction <add>, %38, %cst_14 [1] : vector<8x8xf32> to vector<8xf32>
    %40 = vector.shape_cast %39 : vector<8xf32> to vector<8x1xf32>
    %41 = arith.truncf %38 : vector<8x8xf32> to vector<8x8xbf16>
    %cst_15 = arith.constant dense<0.000000e+00> : vector<8x16xf32>
    %42 = tpu.matmul %41, %32, %cst_15 {dimension_numbers = #tpu.dot_dimension_numbers<[1], [0], [0], [1], [0, 0, 1, 1], [], []>} : vector<8x8xbf16>, vector<8x16xbf16>, vector<8x16xf32> -> vector<8x16xf32>
    %43 = tpu.reciprocal %40 {approx = true} : vector<8x1xf32> -> vector<8x1xf32>
    %44 = vector.broadcast %43 : vector<8x1xf32> to vector<8x16xf32>
    %45 = arith.mulf %42, %44 : vector<8x16xf32>
    %46 = arith.truncf %45 : vector<8x16xf32> to vector<8x16xbf16>
    %c0_16 = arith.constant 0 : index
    %c32 = arith.constant 32 : index
    %47 = vector.load %arg7[%c0_16, %c32] : memref<8x64xbf16, #tpu.memory_space<vmem>>, vector<8x16xbf16>
    tpu.vector_store %arg7[%c0_16, %c32], %46 {strides = array<i32>} : memref<8x64xbf16, #tpu.memory_space<vmem>>, vector<8x16xbf16>,
    %48 = vector.extract_strided_slice %9 {offsets = [0, 48], sizes = [8, 8], strides = [1, 1]} : vector<8x64xbf16> to vector<8x8xbf16>
    %49 = vector.extract_strided_slice %10 {offsets = [0, 48], sizes = [8, 8], strides = [1, 1]} : vector<8x64xbf16> to vector<8x8xbf16>
    %50 = vector.extract_strided_slice %11 {offsets = [0, 48], sizes = [8, 8], strides = [1, 1]} : vector<8x64xbf16> to vector<8x8xbf16>
    %cst_17 = arith.constant dense<0.000000e+00> : vector<8x8xf32>
    %51 = tpu.matmul %48, %49, %cst_17 {dimension_numbers = #tpu.dot_dimension_numbers<[1], [1], [0], [0], [0, 0, 1, 0], [], []>} : vector<8x8xbf16>, vector<8x8xbf16>, vector<8x8xf32> -> vector<8x8xf32>
    %cst_18 = arith.constant dense<0xFF800000> : vector<8xf32>
    %52 = vector.multi_reduction <maximumf>, %51, %cst_18 [1] : vector<8x8xf32> to vector<8xf32>
    %53 = vector.shape_cast %52 : vector<8xf32> to vector<8x1xf32>
    %54 = vector.broadcast %53 : vector<8x1xf32> to vector<8x8xf32>
    %55 = arith.subf %51, %54 : vector<8x8xf32>
    %56 = math.exp %55 : vector<8x8xf32>
    %cst_19 = arith.constant dense<0.000000e+00> : vector<8xf32>
    %57 = vector.multi_reduction <add>, %56, %cst_19 [1] : vector<8x8xf32> to vector<8xf32>
    %58 = vector.shape_cast %57 : vector<8xf32> to vector<8x1xf32>
    %59 = arith.truncf %56 : vector<8x8xf32> to vector<8x8xbf16>
    %cst_20 = arith.constant dense<0.000000e+00> : vector<8x8xf32>
    %60 = tpu.matmul %59, %50, %cst_20 {dimension_numbers = #tpu.dot_dimension_numbers<[1], [0], [0], [1], [0, 0, 1, 1], [], []>} : vector<8x8xbf16>, vector<8x8xbf16>, vector<8x8xf32> -> vector<8x8xf32>
    %61 = tpu.reciprocal %58 {approx = true} : vector<8x1xf32> -> vector<8x1xf32>
    %62 = vector.broadcast %61 : vector<8x1xf32> to vector<8x8xf32>
    %63 = arith.mulf %60, %62 : vector<8x8xf32>
    %64 = arith.truncf %63 : vector<8x8xf32> to vector<8x8xbf16>
    %c0_21 = arith.constant 0 : index
    %c48 = arith.constant 48 : index
    %65 = vector.load %arg7[%c0_21, %c48] : memref<8x64xbf16, #tpu.memory_space<vmem>>, vector<8x8xbf16>
    tpu.vector_store %arg7[%c0_21, %c48], %64 {strides = array<i32>} : memref<8x64xbf16, #tpu.memory_space<vmem>>, vector<8x8xbf16>,
    %66 = vector.extract_strided_slice %9 {offsets = [0, 56], sizes = [8, 8], strides = [1, 1]} : vector<8x64xbf16> to vector<8x8xbf16>
    %67 = vector.extract_strided_slice %10 {offsets = [0, 56], sizes = [8, 8], strides = [1, 1]} : vector<8x64xbf16> to vector<8x8xbf16>
    %68 = vector.extract_strided_slice %11 {offsets = [0, 56], sizes = [8, 8], strides = [1, 1]} : vector<8x64xbf16> to vector<8x8xbf16>
    %cst_22 = arith.constant dense<0.000000e+00> : vector<8x8xf32>
    %69 = tpu.matmul %66, %67, %cst_22 {dimension_numbers = #tpu.dot_dimension_numbers<[1], [1], [0], [0], [0, 0, 1, 0], [], []>} : vector<8x8xbf16>, vector<8x8xbf16>, vector<8x8xf32> -> vector<8x8xf32>
    %cst_23 = arith.constant dense<0xFF800000> : vector<8xf32>
    %70 = vector.multi_reduction <maximumf>, %69, %cst_23 [1] : vector<8x8xf32> to vector<8xf32>
    %71 = vector.shape_cast %70 : vector<8xf32> to vector<8x1xf32>
    %72 = vector.broadcast %71 : vector<8x1xf32> to vector<8x8xf32>
    %73 = arith.subf %69, %72 : vector<8x8xf32>
    %74 = math.exp %73 : vector<8x8xf32>
    %cst_24 = arith.constant dense<0.000000e+00> : vector<8xf32>
    %75 = vector.multi_reduction <add>, %74, %cst_24 [1] : vector<8x8xf32> to vector<8xf32>
    %76 = vector.shape_cast %75 : vector<8xf32> to vector<8x1xf32>
    %77 = arith.truncf %74 : vector<8x8xf32> to vector<8x8xbf16>
    %cst_25 = arith.constant dense<0.000000e+00> : vector<8x8xf32>
    %78 = tpu.matmul %77, %68, %cst_25 {dimension_numbers = #tpu.dot_dimension_numbers<[1], [0], [0], [1], [0, 0, 1, 1], [], []>} : vector<8x8xbf16>, vector<8x8xbf16>, vector<8x8xf32> -> vector<8x8xf32>
    %79 = tpu.reciprocal %76 {approx = true} : vector<8x1xf32> -> vector<8x1xf32>
    %80 = vector.broadcast %79 : vector<8x1xf32> to vector<8x8xf32>
    %81 = arith.mulf %78, %80 : vector<8x8xf32>
    %82 = arith.truncf %81 : vector<8x8xf32> to vector<8x8xbf16>
    %c0_26 = arith.constant 0 : index
    %c56 = arith.constant 56 : index
    %83 = vector.load %arg7[%c0_26, %c56] : memref<8x64xbf16, #tpu.memory_space<vmem>>, vector<8x8xbf16>
    tpu.vector_store %arg7[%c0_26, %c56], %82 {strides = array<i32>} : memref<8x64xbf16, #tpu.memory_space<vmem>>, vector<8x8xbf16>,
    %c0_27 = arith.constant 0 : index
    %c0_28 = arith.constant 0 : index
    %84 = vector.load %arg7[%c0_27, %c0_28] : memref<8x64xbf16, #tpu.memory_space<vmem>>, vector<8x64xbf16>
    %c0_29 = arith.constant 0 : index
    %c0_30 = arith.constant 0 : index
    %85 = vector.load %arg4[%c0_29, %c0_30] : memref<64x64xbf16, #tpu.memory_space<vmem>>, vector<64x64xbf16>
    %cst_31 = arith.constant dense<0.000000e+00> : vector<8x64xf32>
    %86 = tpu.matmul %84, %85, %cst_31 {dimension_numbers = #tpu.dot_dimension_numbers<[1], [0], [0], [1], [0, 0, 1, 1], [], []>} : vector<8x64xbf16>, vector<64x64xbf16>, vector<8x64xf32> -> vector<8x64xf32>
    %c0_32 = arith.constant 0 : index
    %c0_33 = arith.constant 0 : index
    %87 = vector.load %arg5[%c0_32, %c0_33] : memref<1x64xf32, #tpu.memory_space<vmem>>, vector<1x64xf32>
    %88 = vector.broadcast %87 : vector<1x64xf32> to vector<8x64xf32>
    %89 = arith.addf %86, %88 : vector<8x64xf32>
    %c0_34 = arith.constant 0 : index
    %c0_35 = arith.constant 0 : index
    %c0_36 = arith.constant 0 : index
    %90 = vector.load %arg6[%c0_34, %c0_35, %c0_36] : memref<1x8x64xf32, #tpu.memory_space<vmem>>, vector<1x8x64xf32>
    %91 = vector.shape_cast %90 : vector<1x8x64xf32> to vector<8x64xf32>
    %92 = vector.shape_cast %89 : vector<8x64xf32> to vector<1x8x64xf32>
    tpu.vector_store %arg6[%c0_34, %c0_35, %c0_36], %92 {strides = array<i32>} : memref<1x8x64xf32, #tpu.memory_space<vmem>>, vector<1x8x64xf32>,
    return
  }
  func.func @transform_0(%arg0: i32) -> (i32, i32, i32) {
    %c0_i32 = arith.constant 0 : i32
    %c0_i32_0 = arith.constant 0 : i32
    %c0_i32_1 = arith.constant 0 : i32
    return %arg0, %c0_i32, %c0_i32_0 : i32, i32, i32
  }
  func.func @transform_1(%arg0: i32) -> (i32, i32) {
    %c0_i32 = arith.constant 0 : i32
    %c0_i32_0 = arith.constant 0 : i32
    %c0_i32_1 = arith.constant 0 : i32
    return %c0_i32, %c0_i32_0 : i32, i32
  }
  func.func @transform_2(%arg0: i32) -> (i32, i32) {
    %c0_i32 = arith.constant 0 : i32
    %c0_i32_0 = arith.constant 0 : i32
    %c0_i32_1 = arith.constant 0 : i32
    return %c0_i32, %c0_i32_0 : i32, i32
  }
  func.func @transform_3(%arg0: i32) -> (i32, i32) {
    %c0_i32 = arith.constant 0 : i32
    %c0_i32_0 = arith.constant 0 : i32
    %c0_i32_1 = arith.constant 0 : i32
    return %c0_i32, %c0_i32_0 : i32, i32
  }
  func.func @transform_4(%arg0: i32) -> (i32, i32) {
    %c0_i32 = arith.constant 0 : i32
    %c0_i32_0 = arith.constant 0 : i32
    %c0_i32_1 = arith.constant 0 : i32
    return %c0_i32, %c0_i32_0 : i32, i32
  }
  func.func @transform_5(%arg0: i32) -> (i32, i32, i32) {
    %c0_i32 = arith.constant 0 : i32
    %c0_i32_0 = arith.constant 0 : i32
    %c0_i32_1 = arith.constant 0 : i32
    return %arg0, %c0_i32, %c0_i32_0 : i32, i32, i32
  }
}

</mosaic_0001>

<llo_original>
// kernel: tpu_custom_call.1
$region0: #{tpu_custom_call.1}
  #allocation0 [shape = 'u32[]', space=smem, size = 0x4, offset = 0x4, fixed_abs, tag = 'smem constant byte address 0x4 - core index']
  #allocation1 [shape = 'u32[72,128]{1,0:T(1,128)}', space=vmem, size = 0x9000, scoped, tag = 'internal scratch']
  #allocation2 [shape = 'bf16[8,64]{1,0:T(8,128)(2,1)}', space=vmem, size = 0x800, scoped, tag = 'scratch operand']
  %s0 = inlined_call_operand.hbm [shape: f32[2,8,64], index: 0, kind: input, shape index: {}]
  %s1 = inlined_call_operand.hbm [shape: bf16[64,192], index: 1, kind: input, shape index: {}]
  %s2 = inlined_call_operand.hbm [shape: f32[1,192], index: 2, kind: input, shape index: {}]
  %s3 = inlined_call_operand.hbm [shape: bf16[64,64], index: 3, kind: input, shape index: {}]
  %s4 = inlined_call_operand.vmem [shape: f32[1,64], index: 4, kind: input, shape index: {}]
  %s5 = inlined_call_operand.hbm [shape: f32[2,8,64], index: 5, kind: output, shape index: {}]
  %s6 = sld [smem:[#allocation0]]
  $region69: #{tpu_custom_call.1} parent=0
    _
  %s8 = ssub.s32 1, %s6
  %s9 = scalar_select 0, %s8, %s6
  $region1: #{tpu_custom_call.1} parent=0
    #allocation3 [shape = 'u8[8192]{0}', space=vmem, size = 0x2000, scoped, tag = 'input window, operand 0']
    #allocation4 [shape = 's32[2]{0}', space=sflag, size = 0x8, scoped, tag = 'scoped memory for tpu_custom_call.1']
    #allocation5 [shape = 's32[2]{0}', space=sflag, size = 0x8, scoped, tag = 'scoped memory for tpu_custom_call.1']
    #allocation6 [shape = 'u8[32768]{0}', space=vmem, size = 0x8000, scoped, tag = 'input window, operand 1, single buffered']
    #allocation7 [shape = 's32[1]{0}', space=sflag, size = 0x4, scoped, tag = 'scoped memory for tpu_custom_call.1']
    #allocation8 [shape = 'u8[1024]{0}', space=vmem, size = 0x400, scoped, tag = 'input window, operand 2, single buffered']
    #allocation9 [shape = 'u8[16384]{0}', space=vmem, size = 0x4000, scoped, tag = 'input window, operand 3, single buffered']
    #allocation10 [shape = 's32[1]{0}', space=sflag, size = 0x4, scoped, tag = 'scoped memory for tpu_custom_call.1']
    #allocation11 [shape = 'u8[8192]{0}', space=vmem, size = 0x2000, scoped, tag = 'output window, operand 0']
    %10 = vsyncpa [#allocation4], 0
    %s11 = scalar_lea.sflag [#allocation4], 1
    %12 = vsyncpa %s11, 0
    %13 = vsyncpa [#allocation7], 0
    %14 = vsyncpa [#allocation10], 0
    %15 = vsyncpa [#allocation5], 0
    %s16 = scalar_lea.sflag [#allocation5], 1
    %17 = vsyncpa %s16, 0
    loop: start=0, step=1, limit=4
    $region2: #{tpu_custom_call.1} parent=1 // loop_pre_header
      _
    $region3: #{tpu_custom_call.1} parent=1 // loop_header
      %s19 = sphi 0, %s23
      %p20 = scmp.ge.s32.totalorder %s19, 4
      %s29 = sphi 0, %s31
      %s32 = sphi 0, %s29
      %s33 = sphi 0, %s32
      %s49 = sphi 0, %s33
      %s53 = sphi 0, %s53
      %s55 = sphi 0, %s53
      %s56 = sphi 0, %s55
      %s70 = sphi 0, %s56
      %s74 = sphi 0, %s74
      %s76 = sphi 0, %s74
      %s77 = sphi 0, %s76
      %s91 = sphi 0, %s77
      %s95 = sphi 0, %s95
      %s97 = sphi 0, %s95
      %s98 = sphi 0, %s97
      %s112 = sphi 0, %s98
      %s116 = sphi 0, %s116
      %s118 = sphi 0, %s116
      %s119 = sphi 0, %s118
      %s133 = sphi 0, %s119
      %s139 = sphi 0, %s141
      %s142 = sphi 0, %s139
      %s143 = sphi 0, %s142
      %s159 = sphi 0, %s143
    $region4: #{tpu_custom_call.1} parent=1 // loop_header_branch
      %22 = sbr.rel (%p20) target = $region8
    $region5: #{tpu_custom_call.1} parent=1 // loop_body
      %s24 = ssub.s32 %s19, 1
      %s25 = ssub.s32 %s19, 2
      %s26 = sadd.s32 %s19, 1
      %s27 = ssub.s32 %s19, %s26
      %p28 = scmp.eq.s32.totalorder %s27, 0
      %s30 = sadd.s32 %s29, 1
      %s31 = scalar_select %p28, %s29, %s30
      %p34 = pneg %p28
      %p35 = scmp.eq.s32.totalorder %s19, 1
      %p36 = por %p34, %p35
      %p37 = scmp.ne.s32.totalorder %s29, %s32
      %p38 = scmp.eq.s32.totalorder %s19, 0
      %p39 = por %p37, %p38
      %p40 = scmp.ne.s32.totalorder %s29, %s32
      %p41 = scmp.eq.s32.totalorder %s24, 1
      %p42 = por %p40, %p41
      %p43 = scmp.ne.s32.totalorder %s32, %s33
      %p44 = scmp.eq.s32.totalorder %s24, 0
      %p45 = por %p43, %p44
      %p46 = scmp.ne.s32.totalorder %s32, %s33
      %p47 = scmp.eq.s32.totalorder %s25, 1
      %p48 = por %p46, %p47
      %p50 = scmp.ne.s32.totalorder %s33, %s49
      %p51 = scmp.eq.s32.totalorder %s25, 0
      %p52 = por %p50, %p51
      %s54 = sadd.s32 %s53, 1
      %p57 = scmp.eq.s32.totalorder %s19, 1
      %p58 = scmp.ne.s32.totalorder %s53, %s55
      %p59 = scmp.eq.s32.totalorder %s19, 0
      %p60 = por %p58, %p59
      %p61 = scmp.ne.s32.totalorder %s53, %s55
      %p62 = scmp.eq.s32.totalorder %s24, 1
      %p63 = por %p61, %p62
      %p64 = scmp.ne.s32.totalorder %s55, %s56
      %p65 = scmp.eq.s32.totalorder %s24, 0
      %p66 = por %p64, %p65
      %p67 = scmp.ne.s32.totalorder %s55, %s56
      %p68 = scmp.eq.s32.totalorder %s25, 1
      %p69 = por %p67, %p68
      %p71 = scmp.ne.s32.totalorder %s56, %s70
      %p72 = scmp.eq.s32.totalorder %s25, 0
      %p73 = por %p71, %p72
      %s75 = sadd.s32 %s74, 1
      %p78 = scmp.eq.s32.totalorder %s19, 1
      %p79 = scmp.ne.s32.totalorder %s74, %s76
      %p80 = scmp.eq.s32.totalorder %s19, 0
      %p81 = por %p79, %p80
      %p82 = scmp.ne.s32.totalorder %s74, %s76
      %p83 = scmp.eq.s32.totalorder %s24, 1
      %p84 = por %p82, %p83
      %p85 = scmp.ne.s32.totalorder %s76, %s77
      %p86 = scmp.eq.s32.totalorder %s24, 0
      %p87 = por %p85, %p86
      %p88 = scmp.ne.s32.totalorder %s76, %s77
      %p89 = scmp.eq.s32.totalorder %s25, 1
      %p90 = por %p88, %p89
      %p92 = scmp.ne.s32.totalorder %s77, %s91
      %p93 = scmp.eq.s32.totalorder %s25, 0
      %p94 = por %p92, %p93
      %s96 = sadd.s32 %s95, 1
      %p99 = scmp.eq.s32.totalorder %s19, 1
      %p100 = scmp.ne.s32.totalorder %s95, %s97
      %p101 = scmp.eq.s32.totalorder %s19, 0
      %p102 = por %p100, %p101
      %p103 = scmp.ne.s32.totalorder %s95, %s97
      %p104 = scmp.eq.s32.totalorder %s24, 1
      %p105 = por %p103, %p104
      %p106 = scmp.ne.s32.totalorder %s97, %s98
      %p107 = scmp.eq.s32.totalorder %s24, 0
      %p108 = por %p106, %p107
      %p109 = scmp.ne.s32.totalorder %s97, %s98
      %p110 = scmp.eq.s32.totalorder %s25, 1
      %p111 = por %p109, %p110
      %p113 = scmp.ne.s32.totalorder %s98, %s112
      %p114 = scmp.eq.s32.totalorder %s25, 0
      %p115 = por %p113, %p114
      %s117 = sadd.s32 %s116, 1
      %p120 = scmp.eq.s32.totalorder %s19, 1
      %p121 = scmp.ne.s32.totalorder %s116, %s118
      %p122 = scmp.eq.s32.totalorder %s19, 0
      %p123 = por %p121, %p122
      %p124 = scmp.ne.s32.totalorder %s116, %s118
      %p125 = scmp.eq.s32.totalorder %s24, 1
      %p126 = por %p124, %p125
      %p127 = scmp.ne.s32.totalorder %s118, %s119
      %p128 = scmp.eq.s32.totalorder %s24, 0
      %p129 = por %p127, %p128
      %p130 = scmp.ne.s32.totalorder %s118, %s119
      %p131 = scmp.eq.s32.totalorder %s25, 1
      %p132 = por %p130, %p131
      %p134 = scmp.ne.s32.totalorder %s119, %s133
      %p135 = scmp.eq.s32.totalorder %s25, 0
      %p136 = por %p134, %p135
      %s137 = ssub.s32 %s19, %s26
      %p138 = scmp.eq.s32.totalorder %s137, 0
      %s140 = sadd.s32 %s139, 1
      %s141 = scalar_select %p138, %s139, %s140
      %p144 = pneg %p138
      %p145 = scmp.eq.s32.totalorder %s19, 1
      %p146 = por %p144, %p145
      %p147 = scmp.ne.s32.totalorder %s139, %s142
      %p148 = scmp.eq.s32.totalorder %s19, 0
      %p149 = por %p147, %p148
      %p150 = scmp.ne.s32.totalorder %s139, %s142
      %p151 = scmp.eq.s32.totalorder %s24, 1
      %p152 = por %p150, %p151
      %p153 = scmp.ne.s32.totalorder %s142, %s143
      %p154 = scmp.eq.s32.totalorder %s24, 0
      %p155 = por %p153, %p154
      %p156 = scmp.ne.s32.totalorder %s142, %s143
      %p157 = scmp.eq.s32.totalorder %s25, 1
      %p158 = por %p156, %p157
      %p160 = scmp.ne.s32.totalorder %s143, %s159
      %p161 = scmp.eq.s32.totalorder %s25, 0
      %p162 = por %p160, %p161
      %p163 = scmp.le.s32.totalorder 1, %s19
      %p164 = scmp.lt.s32.totalorder %s19, 3
      %p165 = pnand %p163, %p164
      %p166 = pneg %p165
      // Predicated region
      $region9: #{tpu_custom_call.1} parent=5 // pred_check
        _
      $region10: #{tpu_custom_call.1} parent=5 // pred_check_branch
        %168 = sbr.rel (%p165) target = $region12
      $region11: #{tpu_custom_call.1} parent=5 // pred_region
        %s169 = ssub.s32 %s19, 1
        // Predicated region
        $region13: #{tpu_custom_call.1} parent=11 // pred_check
          %p170 = pneg %p66
        $region14: #{tpu_custom_call.1} parent=11 // pred_check_branch
          %172 = sbr.rel (%p170) target = $region16
        $region15: #{tpu_custom_call.1} parent=11 // pred_region
          %174 = vsyncadd [#allocation7], 0
          %s175 = sshll.u32 %s1, 4
          %s176 = int_to_ptr.hbm [resolvable:$true] %s175
          %s177 = sshll.u32 [#allocation6], 4
          %s178 = int_to_ptr.vmem [resolvable:$true] %s177
          %183 = dma.hbm_to_vmem [thread:$0]  %s176, 1024, %s178, [#allocation7], 128, 128, 8
        $region16: #{tpu_custom_call.1} parent=11 // pred_fallthru
          _
        // Predicated region
        $region17: #{tpu_custom_call.1} parent=11 // pred_check
          %p184 = pneg %p87
        $region18: #{tpu_custom_call.1} parent=11 // pred_check_branch
          %186 = sbr.rel (%p184) target = $region20
        $region19: #{tpu_custom_call.1} parent=11 // pred_region
          %188 = vsyncadd [#allocation7], 0
          %s190 = sshll.u32 %s2, 4
          %s191 = int_to_ptr.hbm [resolvable:$true] %s190
          %s192 = sshll.u32 [#allocation8], 4
          %s193 = int_to_ptr.vmem [resolvable:$true] %s192
          %195 = dma.hbm_to_vmem [thread:$0]  %s191, 32, %s193, [#allocation7]
        $region20: #{tpu_custom_call.1} parent=11 // pred_fallthru
          _
        // Predicated region
        $region21: #{tpu_custom_call.1} parent=11 // pred_check
          %p196 = pneg %p108
        $region22: #{tpu_custom_call.1} parent=11 // pred_check_branch
          %198 = sbr.rel (%p196) target = $region24
        $region23: #{tpu_custom_call.1} parent=11 // pred_region
          %200 = vsyncadd [#allocation10], 0
          %s201 = sshll.u32 %s3, 4
          %s202 = int_to_ptr.hbm [resolvable:$true] %s201
          %s203 = sshll.u32 [#allocation9], 4
          %s204 = int_to_ptr.vmem [resolvable:$true] %s203
          %209 = dma.hbm_to_vmem [thread:$0]  %s202, 512, %s204, [#allocation10], 64, 64, 4
        $region24: #{tpu_custom_call.1} parent=11 // pred_fallthru
          _
        // Predicated region
        $region25: #{tpu_custom_call.1} parent=11 // pred_check
          %p210 = pneg %p129
        $region26: #{tpu_custom_call.1} parent=11 // pred_check_branch
          %212 = sbr.rel (%p210) target = $region28
        $region27: #{tpu_custom_call.1} parent=11 // pred_region
          _
        $region28: #{tpu_custom_call.1} parent=11 // pred_fallthru
          _
      $region12: #{tpu_custom_call.1} parent=5 // pred_fallthru
        _
      %p213 = scmp.lt.s32.totalorder %s19, 2
      // Predicated region
      $region29: #{tpu_custom_call.1} parent=5 // pred_check
        %p214 = pneg %p213
      $region30: #{tpu_custom_call.1} parent=5 // pred_check_branch
        %216 = sbr.rel (%p214) target = $region32
      $region31: #{tpu_custom_call.1} parent=5 // pred_region
        // Predicated region
        $region33: #{tpu_custom_call.1} parent=31 // pred_check
          %p217 = pneg %p39
        $region34: #{tpu_custom_call.1} parent=31 // pred_check_branch
          %219 = sbr.rel (%p217) target = $region36
        $region35: #{tpu_custom_call.1} parent=31 // pred_region
          %s220 = sand.u32 %s29, 1
          %s221 = scalar_lea.sflag [#allocation4], %s220
          %s222 = sand.u32 %s29, 1
          %s223 = smul.addr %s222, 8
          %s224 = scalar_lea.vmem [#allocation3], %s223
          %226 = vsyncadd %s221, 0
          %s227 = smul.addr %s19, 8
          %s228 = scalar_lea.hbm %s0, %s227
          %s230 = sshll.u32 %s228, 4
          %s231 = int_to_ptr.hbm [resolvable:$true] %s230
          %s232 = sshll.u32 %s224, 4
          %s233 = int_to_ptr.vmem [resolvable:$true] %s232
          %235 = dma.hbm_to_vmem [thread:$0]  %s231, 128, %s233, %s221
        $region36: #{tpu_custom_call.1} parent=31 // pred_fallthru
          _
      $region32: #{tpu_custom_call.1} parent=5 // pred_fallthru
        _
      %p236 = scmp.le.s32.totalorder 1, %s19
      %p237 = scmp.lt.s32.totalorder %s19, 3
      %p238 = pnand %p236, %p237
      %p239 = pneg %p238
      // Predicated region
      $region37: #{tpu_custom_call.1} parent=5 // pred_check
        _
      $region38: #{tpu_custom_call.1} parent=5 // pred_check_branch
        %241 = sbr.rel (%p238) target = $region40
      $region39: #{tpu_custom_call.1} parent=5 // pred_region
        %s242 = ssub.s32 %s19, 1
        %s243 = sand.u32 %s32, 1
        %s244 = scalar_lea.sflag [#allocation4], %s243
        %s245 = sand.u32 %s32, 1
        %s246 = smul.addr %s245, 8
        %s247 = scalar_lea.vmem [#allocation3], %s246
        // Predicated region
        $region41: #{tpu_custom_call.1} parent=39 // pred_check
          %p248 = pneg %p45
        $region42: #{tpu_custom_call.1} parent=39 // pred_check_branch
          %250 = sbr.rel (%p248) target = $region44
        $region43: #{tpu_custom_call.1} parent=39 // pred_region
          %252 = dma.done %s244, 128
        $region44: #{tpu_custom_call.1} parent=39 // pred_fallthru
          _
        // Predicated region
        $region45: #{tpu_custom_call.1} parent=39 // pred_check
          %p253 = pneg %p66
        $region46: #{tpu_custom_call.1} parent=39 // pred_check_branch
          %255 = sbr.rel (%p253) target = $region48
        $region47: #{tpu_custom_call.1} parent=39 // pred_region
          %257 = dma.done [#allocation7], 1024
        $region48: #{tpu_custom_call.1} parent=39 // pred_fallthru
          _
        // Predicated region
        $region49: #{tpu_custom_call.1} parent=39 // pred_check
          %p258 = pneg %p87
        $region50: #{tpu_custom_call.1} parent=39 // pred_check_branch
          %260 = sbr.rel (%p258) target = $region52
        $region51: #{tpu_custom_call.1} parent=39 // pred_region
          %262 = dma.done [#allocation7], 32
        $region52: #{tpu_custom_call.1} parent=39 // pred_fallthru
          _
        // Predicated region
        $region53: #{tpu_custom_call.1} parent=39 // pred_check
          %p263 = pneg %p108
        $region54: #{tpu_custom_call.1} parent=39 // pred_check_branch
          %265 = sbr.rel (%p263) target = $region56
        $region55: #{tpu_custom_call.1} parent=39 // pred_region
          %267 = dma.done [#allocation10], 512
        $region56: #{tpu_custom_call.1} parent=39 // pred_fallthru
          _
        %s268 = sand.u32 %s32, 1
        %s269 = scalar_lea.sflag [#allocation4], %s268
        %s270 = sand.u32 %s32, 1
        %s271 = smul.addr %s270, 8
        %s272 = scalar_lea.vmem [#allocation3], %s271
        %p273 = pneg %p45
        %p274 = pneg %p42
        %p275 = pneg %p66
        %p276 = pneg %p63
        %p277 = pneg %p87
        %p278 = pneg %p84
        %p279 = pneg %p108
        %p280 = pneg %p105
        %p281 = pneg %p129
        %p282 = pneg %p126
        %p283 = pneg %p155
        %p284 = pneg %p152
        %s285 = sand.u32 %s142, 1
        %s286 = scalar_lea.sflag [#allocation5], %s285
        %s287 = sand.u32 %s142, 1
        %s288 = smul.addr %s287, 8
        %s289 = scalar_lea.vmem [#allocation11], %s288
        %v291 = vld [vmem:[%s247] sm:$0xff]
        %v292 = vpack.c.bf16 %v291, %v291
        %v293 = vld [vmem:[#allocation6] sm:$0xff]
        %v294 = vld [vmem:[#allocation6 + $0x8] sm:$0xff]
        %v295 = vld [vmem:[#allocation6 + $0x10] sm:$0xff]
        %v296 = vld [vmem:[#allocation6 + $0x18] sm:$0xff]
        %v297 = vld [vmem:[#allocation6 + $0x20] sm:$0xff]
        %v298 = vld [vmem:[#allocation6 + $0x28] sm:$0xff]
        %v299 = vld [vmem:[#allocation6 + $0x30] sm:$0xff]
        %v300 = vld [vmem:[#allocation6 + $0x38] sm:$0xff]
        %v301 = vld [vmem:[#allocation8] sm:$0x3]
        %v303 = vperm.slane %v301, 0
        %v304 = vperm.slane %v301, 1
        %v315 = vunpack.c.l.b16 %v293
        %v316 = vunpack.c.h.b16 %v293
        %v317 = vunpack.c.l.b16 %v294
        %v318 = vunpack.c.h.b16 %v294
        %v319 = vunpack.c.l.b16 %v295
        %v320 = vunpack.c.h.b16 %v295
        %v321 = vunpack.c.l.b16 %v296
        %v322 = vunpack.c.h.b16 %v296
        %v323 = vunpack.c.l.b16 %v297
        %v324 = vunpack.c.h.b16 %v297
        %v325 = vunpack.c.l.b16 %v298
        %v326 = vunpack.c.h.b16 %v298
        %v327 = vunpack.c.l.b16 %v299
        %v328 = vunpack.c.h.b16 %v299
        %v329 = vunpack.c.l.b16 %v300
        %v330 = vunpack.c.h.b16 %v300
        %v331 = vpack.c.b16 %v317, %v315
        %v332 = vpack.c.b16 %v318, %v316
        %v333 = vpack.c.b16 %v321, %v319
        %v334 = vpack.c.b16 %v322, %v320
        %v335 = vpack.c.b16 %v325, %v323
        %v336 = vpack.c.b16 %v326, %v324
        %v337 = vpack.c.b16 %v329, %v327
        %v338 = vpack.c.b16 %v330, %v328
        %vm347 = vcmask 523264
        %v349 = vsel %vm347, %v292, 0
        %351 = vmatpush.bf16.msra.mxu0 0
        %352 = vmatpush.bf16.msra.mxu0 0
        %353 = vmatpush.bf16.msra.mxu0 0
        %354 = vmatpush.bf16.msra.mxu0 0
        %355 = vmatpush.bf16.msra.mxu0 %v337
        %356 = vmatpush.bf16.msra.mxu0 %v335
        %357 = vmatpush.bf16.msra.mxu0 %v333
        %358 = vmatpush.bf16.msra.mxu0 %v331
        %359 = vmatmul.bf16.gmra.mxu0 %v349
        %v360 = vpop.f32.mrf.mxu0
        %v361 = vadd.f32 %v303, %v360
        %v362 = vpop.f32.mrf.mxu0
        %363 = vdwg.mxu0
        %364 = vmatpush.bf16.msra.mxu0 0
        %365 = vmatpush.bf16.msra.mxu0 0
        %366 = vmatpush.bf16.msra.mxu0 0
        %367 = vmatpush.bf16.msra.mxu0 0
        %368 = vmatpush.bf16.msra.mxu0 %v338
        %369 = vmatpush.bf16.msra.mxu0 %v336
        %370 = vmatpush.bf16.msra.mxu0 %v334
        %371 = vmatpush.bf16.msra.mxu0 %v332
        %372 = vmatmul.bf16.gmra.mxu0 %v349
        %v373 = vpop.f32.mrf.mxu0
        %v374 = vadd.f32 %v304, %v373
        %v375 = vpop.f32.mrf.mxu0
        %376 = vdwg.mxu0
        %v377 = vpack.c.bf16 %v374, %v361
        %v379 = vunpack.c.l.b16 %v377
        %v380 = vpack.c.b16 %v379, %v379
        %381 = vrot.lane.b32.xlu0 %v380, 64
        %v382 = vpop.permute.xlu0 %381
        %vm383 = vcmask 261120
        %v385 = vsel %vm383, %v377, 0
        %v388 = vsel %vm383, %v382, 0
        %390 = vmatpush.bf16.xpose.msra.mxu0 0
        %391 = vmatpush.bf16.xpose.msra.mxu0 0
        %392 = vmatpush.bf16.xpose.msra.mxu0 0
        %393 = vmatpush.bf16.xpose.msra.mxu0 0
        %394 = vmatpush.bf16.xpose.msra.mxu0 0
        %395 = vmatpush.bf16.xpose.msra.mxu0 0
        %396 = vmatpush.bf16.xpose.msra.mxu0 0
        %397 = vmatpush.bf16.xpose.msra.mxu0 %v388
        %398 = vmatmul.bf16.gmra.mxu0 %v385
        %v399 = vpop.f32.mrf.mxu0
        %v400 = vadd.f32 0.0, %v399
        %v401 = vpop.f32.mrf.mxu0
        %402 = vdwg.mxu0
        %vm403 = vcmask 64512
        %v404 = vsel %vm403, %v400, -inf
        %405 = vmax.xlane.f32.xlu0 %v404
        %v406 = vpop.xlane.xlu0 %405
        %v407 = vsub.f32 %v400, %v406
        %v408 = vmul.f32 %v407, 1.442695
        %v409 = vpow.pop %v408
        %v410 = vsel %vm403, %v409, 0.0
        %411 = vadd.xlane.f32.xlu0 %v410
        %v412 = vpop.xlane.xlu0 %411
        %v413 = vpack.c.bf16 %v409, %v409
        %v414 = vunpack.c.h.b16 %v377
        %v415 = vpack.c.b16 %v414, %v414
        %v417 = vsel %vm403, %v413, 0
        %vm419 = vcmask 1043456
        %v421 = vsel %vm419, %v415, 0
        %423 = vmatpush.bf16.msra.mxu0 0
        %424 = vmatpush.bf16.msra.mxu0 0
        %425 = vmatpush.bf16.msra.mxu0 0
        %426 = vmatpush.bf16.msra.mxu0 0
        %427 = vmatpush.bf16.msra.mxu0 0
        %428 = vmatpush.bf16.msra.mxu0 0
        %429 = vmatpush.bf16.msra.mxu0 0
        %430 = vmatpush.bf16.msra.mxu0 %v421
        %431 = vmatmul.bf16.gmra.mxu0 %v417
        %v432 = vpop.f32.mrf.mxu0
        %v433 = vadd.f32 0.0, %v432
        %v434 = vpop.f32.mrf.mxu0
        %435 = vdwg.mxu0
        %v436 = vrcp.pop %v412
        %v437 = vmul.f32 %v433, %v436
        %v438 = vpack.c.bf16 %v437, %v437
        %vm439 = vcmask 257024
        %440 = vst.msk [vmem:[#allocation2] sm:$0xf] %vm439, %v438
        %441 = vrot.lane.b32.xlu0 %v380, 96
        %v442 = vpop.permute.xlu0 %441
        %443 = vrot.lane.b32.xlu0 %v380, 32
        %v444 = vpop.permute.xlu0 %443
        %vm445 = vcmask 130048
        %v447 = vsel %vm445, %v442, 0
        %v450 = vsel %vm445, %v444, 0
        %452 = vmatpush.bf16.xpose.msra.mxu0 0
        %453 = vmatpush.bf16.xpose.msra.mxu0 0
        %454 = vmatpush.bf16.xpose.msra.mxu0 0
        %455 = vmatpush.bf16.xpose.msra.mxu0 0
        %456 = vmatpush.bf16.xpose.msra.mxu0 0
        %457 = vmatpush.bf16.xpose.msra.mxu0 0
        %458 = vmatpush.bf16.xpose.msra.mxu0 0
        %459 = vmatpush.bf16.xpose.msra.mxu0 %v450
        %460 = vmatmul.bf16.gmra.mxu0 %v447
        %v461 = vpop.f32.mrf.mxu0
        %v462 = vadd.f32 0.0, %v461
        %v463 = vpop.f32.mrf.mxu0
        %464 = vdwg.mxu0
        %v465 = vsel %vm403, %v462, -inf
        %466 = vmax.xlane.f32.xlu0 %v465
        %v467 = vpop.xlane.xlu0 %466
        %v468 = vsub.f32 %v462, %v467
        %v469 = vmul.f32 %v468, 1.442695
        %v470 = vpow.pop %v469
        %v471 = vsel %vm403, %v470, 0.0
        %472 = vadd.xlane.f32.xlu0 %v471
        %v473 = vpop.xlane.xlu0 %472
        %v474 = vpack.c.bf16 %v470, %v470
        %475 = vrot.lane.b32.xlu0 %v415, 96
        %v476 = vpop.permute.xlu0 %475
        %v478 = vsel %vm403, %v474, 0
        %v481 = vsel %vm419, %v476, 0
        %483 = vmatpush.bf16.msra.mxu0 0
        %484 = vmatpush.bf16.msra.mxu0 0
        %485 = vmatpush.bf16.msra.mxu0 0
        %486 = vmatpush.bf16.msra.mxu0 0
        %487 = vmatpush.bf16.msra.mxu0 0
        %488 = vmatpush.bf16.msra.mxu0 0
        %489 = vmatpush.bf16.msra.mxu0 0
        %490 = vmatpush.bf16.msra.mxu0 %v481
        %491 = vmatmul.bf16.gmra.mxu0 %v478
        %v492 = vpop.f32.mrf.mxu0
        %v493 = vadd.f32 0.0, %v492
        %v494 = vpop.f32.mrf.mxu0
        %495 = vdwg.mxu0
        %v496 = vrcp.pop %v473
        %v497 = vmul.f32 %v493, %v496
        %v498 = vpack.c.bf16 %v497, %v497
        %500 = vrot.lane.b32.xlu0 %v498, 32
        %v501 = vpop.permute.xlu0 %500
        %vm503 = vcmask 388352
        %504 = vst.msk [vmem:[#allocation2] sm:$0xf] %vm503, %v501
        %505 = vrot.lane.b32.xlu0 %v380, 80
        %v506 = vpop.permute.xlu0 %505
        %507 = vrot.lane.b32.xlu0 %v380, 16
        %v508 = vpop.permute.xlu0 %507
        %v510 = vsel %vm403, %v506, 0
        %v513 = vsel %vm403, %v508, 0
        %515 = vmatpush.bf16.xpose.msra.mxu0 0
        %516 = vmatpush.bf16.xpose.msra.mxu0 0
        %517 = vmatpush.bf16.xpose.msra.mxu0 0
        %518 = vmatpush.bf16.xpose.msra.mxu0 0
        %519 = vmatpush.bf16.xpose.msra.mxu0 0
        %520 = vmatpush.bf16.xpose.msra.mxu0 0
        %521 = vmatpush.bf16.xpose.msra.mxu0 0
        %522 = vmatpush.bf16.xpose.msra.mxu0 %v513
        %523 = vmatmul.bf16.gmra.mxu0 %v510
        %v524 = vpop.f32.mrf.mxu0
        %v525 = vadd.f32 0.0, %v524
        %v526 = vpop.f32.mrf.mxu0
        %527 = vdwg.mxu0
        %v528 = vsel %vm403, %v525, -inf
        %529 = vmax.xlane.f32.xlu0 %v528
        %v530 = vpop.xlane.xlu0 %529
        %v531 = vsub.f32 %v525, %v530
        %v532 = vmul.f32 %v531, 1.442695
        %v533 = vpow.pop %v532
        %v534 = vsel %vm403, %v533, 0.0
        %535 = vadd.xlane.f32.xlu0 %v534
        %v536 = vpop.xlane.xlu0 %535
        %v537 = vpack.c.bf16 %v533, %v533
        %538 = vrot.lane.b32.xlu0 %v415, 80
        %v539 = vpop.permute.xlu0 %538
        %v541 = vsel %vm403, %v537, 0
        %v544 = vsel %vm419, %v539, 0
        %546 = vmatpush.bf16.msra.mxu0 0
        %547 = vmatpush.bf16.msra.mxu0 0
        %548 = vmatpush.bf16.msra.mxu0 0
        %549 = vmatpush.bf16.msra.mxu0 0
        %550 = vmatpush.bf16.msra.mxu0 0
        %551 = vmatpush.bf16.msra.mxu0 0
        %552 = vmatpush.bf16.msra.mxu0 0
        %553 = vmatpush.bf16.msra.mxu0 %v544
        %554 = vmatmul.bf16.gmra.mxu0 %v541
        %v555 = vpop.f32.mrf.mxu0
        %v556 = vadd.f32 0.0, %v555
        %v557 = vpop.f32.mrf.mxu0
        %558 = vdwg.mxu0
        %v559 = vrcp.pop %v536
        %v560 = vmul.f32 %v556, %v559
        %v561 = vpack.c.bf16 %v560, %v560
        %563 = vrot.lane.b32.xlu0 %v561, 48
        %v564 = vpop.permute.xlu0 %563
        %vm566 = vcmask 454016
        %567 = vst.msk [vmem:[#allocation2] sm:$0xf] %vm566, %v564
        %568 = vrot.lane.b32.xlu0 %v380, 72
        %v569 = vpop.permute.xlu0 %568
        %570 = vrot.lane.b32.xlu0 %v380, 8
        %v571 = vpop.permute.xlu0 %570
        %v573 = vsel %vm403, %v569, 0
        %v576 = vsel %vm403, %v571, 0
        %578 = vmatpush.bf16.xpose.msra.mxu0 0
        %579 = vmatpush.bf16.xpose.msra.mxu0 0
        %580 = vmatpush.bf16.xpose.msra.mxu0 0
        %581 = vmatpush.bf16.xpose.msra.mxu0 0
        %582 = vmatpush.bf16.xpose.msra.mxu0 0
        %583 = vmatpush.bf16.xpose.msra.mxu0 0
        %584 = vmatpush.bf16.xpose.msra.mxu0 0
        %585 = vmatpush.bf16.xpose.msra.mxu0 %v576
        %586 = vmatmul.bf16.gmra.mxu0 %v573
        %v587 = vpop.f32.mrf.mxu0
        %v588 = vadd.f32 0.0, %v587
        %v589 = vpop.f32.mrf.mxu0
        %590 = vdwg.mxu0
        %v591 = vsel %vm403, %v588, -inf
        %592 = vmax.xlane.f32.xlu0 %v591
        %v593 = vpop.xlane.xlu0 %592
        %v594 = vsub.f32 %v588, %v593
        %v595 = vmul.f32 %v594, 1.442695
        %v596 = vpow.pop %v595
        %v597 = vsel %vm403, %v596, 0.0
        %598 = vadd.xlane.f32.xlu0 %v597
        %v599 = vpop.xlane.xlu0 %598
        %v600 = vpack.c.bf16 %v596, %v596
        %601 = vrot.lane.b32.xlu0 %v415, 72
        %v602 = vpop.permute.xlu0 %601
        %v604 = vsel %vm403, %v600, 0
        %v607 = vsel %vm419, %v602, 0
        %609 = vmatpush.bf16.msra.mxu0 0
        %610 = vmatpush.bf16.msra.mxu0 0
        %611 = vmatpush.bf16.msra.mxu0 0
        %612 = vmatpush.bf16.msra.mxu0 0
        %613 = vmatpush.bf16.msra.mxu0 0
        %614 = vmatpush.bf16.msra.mxu0 0
        %615 = vmatpush.bf16.msra.mxu0 0
        %616 = vmatpush.bf16.msra.mxu0 %v607
        %617 = vmatmul.bf16.gmra.mxu0 %v604
        %v618 = vpop.f32.mrf.mxu0
        %v619 = vadd.f32 0.0, %v618
        %v620 = vpop.f32.mrf.mxu0
        %621 = vdwg.mxu0
        %v622 = vrcp.pop %v599
        %v623 = vmul.f32 %v619, %v622
        %v624 = vpack.c.bf16 %v623, %v623
        %626 = vrot.lane.b32.xlu0 %v624, 56
        %v627 = vpop.permute.xlu0 %626
        %vm629 = vcmask 519616
        %630 = vst.msk [vmem:[#allocation2] sm:$0xf] %vm629, %v627
        %v631 = vld [vmem:[#allocation2] sm:$0xf]
        %v632 = vld [vmem:[#allocation9] sm:$0xf]
        %v633 = vld [vmem:[#allocation9 + $0x4] sm:$0xf]
        %v634 = vld [vmem:[#allocation9 + $0x8] sm:$0xf]
        %v635 = vld [vmem:[#allocation9 + $0xc] sm:$0xf]
        %v636 = vld [vmem:[#allocation9 + $0x10] sm:$0xf]
        %v637 = vld [vmem:[#allocation9 + $0x14] sm:$0xf]
        %v638 = vld [vmem:[#allocation9 + $0x18] sm:$0xf]
        %v639 = vld [vmem:[#allocation9 + $0x1c] sm:$0xf]
        %v640 = vld [vmem:[%s4] sm:$0x1]
        %v642 = vperm.slane %v640, 0
        %v652 = vunpack.c.l.b16 %v632
        %v653 = vunpack.c.l.b16 %v633
        %v654 = vunpack.c.l.b16 %v634
        %v655 = vunpack.c.l.b16 %v635
        %v656 = vunpack.c.l.b16 %v636
        %v657 = vunpack.c.l.b16 %v637
        %v658 = vunpack.c.l.b16 %v638
        %v659 = vunpack.c.l.b16 %v639
        %v660 = vpack.c.b16 %v653, %v652
        %v661 = vpack.c.b16 %v655, %v654
        %v662 = vpack.c.b16 %v657, %v656
        %v663 = vpack.c.b16 %v659, %v658
        %v669 = vsel %vm347, %v631, 0
        %671 = vmatpush.bf16.msra.mxu0 0
        %672 = vmatpush.bf16.msra.mxu0 0
        %673 = vmatpush.bf16.msra.mxu0 0
        %674 = vmatpush.bf16.msra.mxu0 0
        %675 = vmatpush.bf16.msra.mxu0 %v663
        %676 = vmatpush.bf16.msra.mxu0 %v662
        %677 = vmatpush.bf16.msra.mxu0 %v661
        %678 = vmatpush.bf16.msra.mxu0 %v660
        %679 = vmatmul.bf16.gmra.mxu0 %v669
        %v680 = vpop.f32.mrf.mxu0
        %v681 = vadd.f32 %v642, %v680
        %v682 = vpop.f32.mrf.mxu0
        %683 = vdwg.mxu0
        %684 = vst.msk [vmem:[%s289] sm:$0xff] %vm347, %v681
        %s685 = sand.u32 %s142, 1
        %s686 = scalar_lea.sflag [#allocation5], %s685
        %s687 = sand.u32 %s142, 1
        %s688 = smul.addr %s687, 8
        %s689 = scalar_lea.vmem [#allocation11], %s688
        // Predicated region
        $region57: #{tpu_custom_call.1} parent=39 // pred_check
          %p690 = pneg %p152
        $region58: #{tpu_custom_call.1} parent=39 // pred_check_branch
          %692 = sbr.rel (%p690) target = $region60
        $region59: #{tpu_custom_call.1} parent=39 // pred_region
          %694 = vsyncadd %s686, 0
          %s695 = smul.addr %s24, 8
          %s696 = scalar_lea.hbm %s5, %s695
          %s698 = sshll.u32 %s689, 4
          %s699 = int_to_ptr.vmem [resolvable:$true] %s698
          %s700 = sshll.u32 %s696, 4
          %s701 = int_to_ptr.hbm [resolvable:$true] %s700
          %703 = dma.vmem_to_hbm [thread:$0]  %s699, 128, %s701, %s686
        $region60: #{tpu_custom_call.1} parent=39 // pred_fallthru
          _
      $region40: #{tpu_custom_call.1} parent=5 // pred_fallthru
        _
      %p704 = scmp.le.s32.totalorder 2, %s19
      // Predicated region
      $region61: #{tpu_custom_call.1} parent=5 // pred_check
        %p705 = pneg %p704
      $region62: #{tpu_custom_call.1} parent=5 // pred_check_branch
        %707 = sbr.rel (%p705) target = $region64
      $region63: #{tpu_custom_call.1} parent=5 // pred_region
        %s708 = ssub.s32 %s19, 2
        // Predicated region
        $region65: #{tpu_custom_call.1} parent=63 // pred_check
          %p709 = pneg %p158
        $region66: #{tpu_custom_call.1} parent=63 // pred_check_branch
          %711 = sbr.rel (%p709) target = $region68
        $region67: #{tpu_custom_call.1} parent=63 // pred_region
          %s712 = sand.u32 %s143, 1
          %s713 = scalar_lea.sflag [#allocation5], %s712
          %s714 = sand.u32 %s143, 1
          %s715 = smul.addr %s714, 8
          %s716 = scalar_lea.vmem [#allocation11], %s715
          %718 = dma.done %s713, 128
        $region68: #{tpu_custom_call.1} parent=63 // pred_fallthru
          _
      $region64: #{tpu_custom_call.1} parent=5 // pred_fallthru
        _
    $region6: #{tpu_custom_call.1} parent=1 // loop_footer
      %s23 = sadd.s32 1, %s19
    $region7: #{tpu_custom_call.1} parent=1 // loop_footer_branch
      %18 = sbr.rel target = $region3
    $region8: #{tpu_custom_call.1} parent=1 // loop_exit
      _
    %719 = vsyncpa [#allocation4], 1
    %s720 = scalar_lea.sflag [#allocation4], 1
    %721 = vsyncpa %s720, 1
    %722 = vsyncpa [#allocation7], 1
    %723 = vsyncpa [#allocation10], 1
    %724 = vsyncpa [#allocation5], 1
    %s725 = scalar_lea.sflag [#allocation5], 1
    %726 = vsyncpa %s725, 1

// kernel: tpu_custom_call.1
$region0: #{tpu_custom_call.1}
  #allocation0 [shape = 'u32[]', space=smem, size = 0x4, offset = 0x4, fixed_abs, tag = 'smem constant byte address 0x4 - core index']
  #allocation1 [shape = 'u32[72,128]{1,0:T(1,128)}', space=vmem, size = 0x9000, scoped, tag = 'internal scratch']
  #allocation2 [shape = 'bf16[8,64]{1,0:T(8,128)(2,1)}', space=vmem, size = 0x800, scoped, tag = 'scratch operand']
  %s0 = inlined_call_operand.hbm [shape: f32[2,8,64], index: 0, kind: input, shape index: {}]
  %s1 = inlined_call_operand.hbm [shape: bf16[64,192], index: 1, kind: input, shape index: {}]
  %s2 = inlined_call_operand.hbm [shape: f32[1,192], index: 2, kind: input, shape index: {}]
  %s3 = inlined_call_operand.hbm [shape: bf16[64,64], index: 3, kind: input, shape index: {}]
  %s4 = inlined_call_operand.vmem [shape: f32[1,64], index: 4, kind: input, shape index: {}]
  %s5 = inlined_call_operand.hbm [shape: f32[2,8,64], index: 5, kind: output, shape index: {}]
  %s6 = sld [smem:[#allocation0]]
  $region69: #{tpu_custom_call.1} parent=0
    _
  %s8 = ssub.s32 1, %s6
  %s9 = scalar_select 0, %s8, %s6
  $region1: #{tpu_custom_call.1} parent=0
    #allocation3 [shape = 'u8[8192]{0}', space=vmem, size = 0x2000, scoped, tag = 'input window, operand 0']
    #allocation4 [shape = 's32[2]{0}', space=sflag, size = 0x8, scoped, tag = 'scoped memory for tpu_custom_call.1']
    #allocation5 [shape = 's32[2]{0}', space=sflag, size = 0x8, scoped, tag = 'scoped memory for tpu_custom_call.1']
    #allocation6 [shape = 'u8[32768]{0}', space=vmem, size = 0x8000, scoped, tag = 'input window, operand 1, single buffered']
    #allocation7 [shape = 's32[1]{0}', space=sflag, size = 0x4, scoped, tag = 'scoped memory for tpu_custom_call.1']
    #allocation8 [shape = 'u8[1024]{0}', space=vmem, size = 0x400, scoped, tag = 'input window, operand 2, single buffered']
    #allocation9 [shape = 'u8[16384]{0}', space=vmem, size = 0x4000, scoped, tag = 'input window, operand 3, single buffered']
    #allocation10 [shape = 's32[1]{0}', space=sflag, size = 0x4, scoped, tag = 'scoped memory for tpu_custom_call.1']
    #allocation11 [shape = 'u8[8192]{0}', space=vmem, size = 0x2000, scoped, tag = 'output window, operand 0']
    %10 = vsyncpa [#allocation4], 0
    %s11 = scalar_lea.sflag [#allocation4], 1
    %12 = vsyncpa %s11, 0
    %13 = vsyncpa [#allocation7], 0
    %14 = vsyncpa [#allocation10], 0
    %15 = vsyncpa [#allocation5], 0
    %s16 = scalar_lea.sflag [#allocation5], 1
    %17 = vsyncpa %s16, 0
    loop: start=0, step=1, limit=4
    $region2: #{tpu_custom_call.1} parent=1 // loop_pre_header
      _
    $region3: #{tpu_custom_call.1} parent=1 // loop_header
      %s19 = sphi 0, %s23
      %p20 = scmp.ge.s32.totalorder %s19, 4
      %s29 = sphi 0, %s31
      %s32 = sphi 0, %s29
      %s33 = sphi 0, %s32
      %s49 = sphi 0, %s33
      %s53 = sphi 0, %s53
      %s55 = sphi 0, %s53
      %s56 = sphi 0, %s55
      %s70 = sphi 0, %s56
      %s74 = sphi 0, %s74
      %s76 = sphi 0, %s74
      %s77 = sphi 0, %s76
      %s91 = sphi 0, %s77
      %s95 = sphi 0, %s95
      %s97 = sphi 0, %s95
      %s98 = sphi 0, %s97
      %s112 = sphi 0, %s98
      %s116 = sphi 0, %s116
      %s118 = sphi 0, %s116
      %s119 = sphi 0, %s118
      %s133 = sphi 0, %s119
      %s139 = sphi 0, %s141
      %s142 = sphi 0, %s139
      %s143 = sphi 0, %s142
      %s159 = sphi 0, %s143
    $region4: #{tpu_custom_call.1} parent=1 // loop_header_branch
      %22 = sbr.rel (%p20) target = $region8
    $region5: #{tpu_custom_call.1} parent=1 // loop_body
      %s24 = ssub.s32 %s19, 1
      %s25 = ssub.s32 %s19, 2
      %s26 = sadd.s32 %s19, 1
      %s27 = ssub.s32 %s19, %s26
      %p28 = scmp.eq.s32.totalorder %s27, 0
      %s30 = sadd.s32 %s29, 1
      %s31 = scalar_select %p28, %s29, %s30
      %p34 = pneg %p28
      %p35 = scmp.eq.s32.totalorder %s19, 1
      %p36 = por %p34, %p35
      %p37 = scmp.ne.s32.totalorder %s29, %s32
      %p38 = scmp.eq.s32.totalorder %s19, 0
      %p39 = por %p37, %p38
      %p40 = scmp.ne.s32.totalorder %s29, %s32
      %p41 = scmp.eq.s32.totalorder %s24, 1
      %p42 = por %p40, %p41
      %p43 = scmp.ne.s32.totalorder %s32, %s33
      %p44 = scmp.eq.s32.totalorder %s24, 0
      %p45 = por %p43, %p44
      %p46 = scmp.ne.s32.totalorder %s32, %s33
      %p47 = scmp.eq.s32.totalorder %s25, 1
      %p48 = por %p46, %p47
      %p50 = scmp.ne.s32.totalorder %s33, %s49
      %p51 = scmp.eq.s32.totalorder %s25, 0
      %p52 = por %p50, %p51
      %s54 = sadd.s32 %s53, 1
      %p57 = scmp.eq.s32.totalorder %s19, 1
      %p58 = scmp.ne.s32.totalorder %s53, %s55
      %p59 = scmp.eq.s32.totalorder %s19, 0
      %p60 = por %p58, %p59
      %p61 = scmp.ne.s32.totalorder %s53, %s55
      %p62 = scmp.eq.s32.totalorder %s24, 1
      %p63 = por %p61, %p62
      %p64 = scmp.ne.s32.totalorder %s55, %s56
      %p65 = scmp.eq.s32.totalorder %s24, 0
      %p66 = por %p64, %p65
      %p67 = scmp.ne.s32.totalorder %s55, %s56
      %p68 = scmp.eq.s32.totalorder %s25, 1
      %p69 = por %p67, %p68
      %p71 = scmp.ne.s32.totalorder %s56, %s70
      %p72 = scmp.eq.s32.totalorder %s25, 0
      %p73 = por %p71, %p72
      %s75 = sadd.s32 %s74, 1
      %p78 = scmp.eq.s32.totalorder %s19, 1
      %p79 = scmp.ne.s32.totalorder %s74, %s76
      %p80 = scmp.eq.s32.totalorder %s19, 0
      %p81 = por %p79, %p80
      %p82 = scmp.ne.s32.totalorder %s74, %s76
      %p83 = scmp.eq.s32.totalorder %s24, 1
      %p84 = por %p82, %p83
      %p85 = scmp.ne.s32.totalorder %s76, %s77
      %p86 = scmp.eq.s32.totalorder %s24, 0
      %p87 = por %p85, %p86
      %p88 = scmp.ne.s32.totalorder %s76, %s77
      %p89 = scmp.eq.s32.totalorder %s25, 1
      %p90 = por %p88, %p89
      %p92 = scmp.ne.s32.totalorder %s77, %s91
      %p93 = scmp.eq.s32.totalorder %s25, 0
      %p94 = por %p92, %p93
      %s96 = sadd.s32 %s95, 1
      %p99 = scmp.eq.s32.totalorder %s19, 1
      %p100 = scmp.ne.s32.totalorder %s95, %s97
      %p101 = scmp.eq.s32.totalorder %s19, 0
      %p102 = por %p100, %p101
      %p103 = scmp.ne.s32.totalorder %s95, %s97
      %p104 = scmp.eq.s32.totalorder %s24, 1
      %p105 = por %p103, %p104
      %p106 = scmp.ne.s32.totalorder %s97, %s98
      %p107 = scmp.eq.s32.totalorder %s24, 0
      %p108 = por %p106, %p107
      %p109 = scmp.ne.s32.totalorder %s97, %s98
      %p110 = scmp.eq.s32.totalorder %s25, 1
      %p111 = por %p109, %p110
      %p113 = scmp.ne.s32.totalorder %s98, %s112
      %p114 = scmp.eq.s32.totalorder %s25, 0
      %p115 = por %p113, %p114
      %s117 = sadd.s32 %s116, 1
      %p120 = scmp.eq.s32.totalorder %s19, 1
      %p121 = scmp.ne.s32.totalorder %s116, %s118
      %p122 = scmp.eq.s32.totalorder %s19, 0
      %p123 = por %p121, %p122
      %p124 = scmp.ne.s32.totalorder %s116, %s118
      %p125 = scmp.eq.s32.totalorder %s24, 1
      %p126 = por %p124, %p125
      %p127 = scmp.ne.s32.totalorder %s118, %s119
      %p128 = scmp.eq.s32.totalorder %s24, 0
      %p129 = por %p127, %p128
      %p130 = scmp.ne.s32.totalorder %s118, %s119
      %p131 = scmp.eq.s32.totalorder %s25, 1
      %p132 = por %p130, %p131
      %p134 = scmp.ne.s32.totalorder %s119, %s133
      %p135 = scmp.eq.s32.totalorder %s25, 0
      %p136 = por %p134, %p135
      %s137 = ssub.s32 %s19, %s26
      %p138 = scmp.eq.s32.totalorder %s137, 0
      %s140 = sadd.s32 %s139, 1
      %s141 = scalar_select %p138, %s139, %s140
      %p144 = pneg %p138
      %p145 = scmp.eq.s32.totalorder %s19, 1
      %p146 = por %p144, %p145
      %p147 = scmp.ne.s32.totalorder %s139, %s142
      %p148 = scmp.eq.s32.totalorder %s19, 0
      %p149 = por %p147, %p148
      %p150 = scmp.ne.s32.totalorder %s139, %s142
      %p151 = scmp.eq.s32.totalorder %s24, 1
      %p152 = por %p150, %p151
      %p153 = scmp.ne.s32.totalorder %s142, %s143
      %p154 = scmp.eq.s32.totalorder %s24, 0
      %p155 = por %p153, %p154
      %p156 = scmp.ne.s32.totalorder %s142, %s143
      %p157 = scmp.eq.s32.totalorder %s25, 1
      %p158 = por %p156, %p157
      %p160 = scmp.ne.s32.totalorder %s143, %s159
      %p161 = scmp.eq.s32.totalorder %s25, 0
      %p162 = por %p160, %p161
      %p163 = scmp.le.s32.totalorder 1, %s19
      %p164 = scmp.lt.s32.totalorder %s19, 3
      %p165 = pnand %p163, %p164
      %p166 = pneg %p165
      // Predicated region
      $region9: #{tpu_custom_call.1} parent=5 // pred_check
        _
      $region10: #{tpu_custom_call.1} parent=5 // pred_check_branch
        %168 = sbr.rel (%p165) target = $region12
      $region11: #{tpu_custom_call.1} parent=5 // pred_region
        %s169 = ssub.s32 %s19, 1
        // Predicated region
        $region13: #{tpu_custom_call.1} parent=11 // pred_check
          %p170 = pneg %p66
        $region14: #{tpu_custom_call.1} parent=11 // pred_check_branch
          %172 = sbr.rel (%p170) target = $region16
        $region15: #{tpu_custom_call.1} parent=11 // pred_region
          %174 = vsyncadd [#allocation7], 0
          %s175 = sshll.u32 %s1, 4
          %s176 = int_to_ptr.hbm [resolvable:$true] %s175
          %s177 = sshll.u32 [#allocation6], 4
          %s178 = int_to_ptr.vmem [resolvable:$true] %s177
          %183 = dma.hbm_to_vmem [thread:$0]  %s176, 1024, %s178, [#allocation7], 128, 128, 8
        $region16: #{tpu_custom_call.1} parent=11 // pred_fallthru
          _
        // Predicated region
        $region17: #{tpu_custom_call.1} parent=11 // pred_check
          %p184 = pneg %p87
        $region18: #{tpu_custom_call.1} parent=11 // pred_check_branch
          %186 = sbr.rel (%p184) target = $region20
        $region19: #{tpu_custom_call.1} parent=11 // pred_region
          %188 = vsyncadd [#allocation7], 0
          %s190 = sshll.u32 %s2, 4
          %s191 = int_to_ptr.hbm [resolvable:$true] %s190
          %s192 = sshll.u32 [#allocation8], 4
          %s193 = int_to_ptr.vmem [resolvable:$true] %s192
          %195 = dma.hbm_to_vmem [thread:$0]  %s191, 32, %s193, [#allocation7]
        $region20: #{tpu_custom_call.1} parent=11 // pred_fallthru
          _
        // Predicated region
        $region21: #{tpu_custom_call.1} parent=11 // pred_check
          %p196 = pneg %p108
        $region22: #{tpu_custom_call.1} parent=11 // pred_check_branch
          %198 = sbr.rel (%p196) target = $region24
        $region23: #{tpu_custom_call.1} parent=11 // pred_region
          %200 = vsyncadd [#allocation10], 0
          %s201 = sshll.u32 %s3, 4
          %s202 = int_to_ptr.hbm [resolvable:$true] %s201
          %s203 = sshll.u32 [#allocation9], 4
          %s204 = int_to_ptr.vmem [resolvable:$true] %s203
          %209 = dma.hbm_to_vmem [thread:$0]  %s202, 512, %s204, [#allocation10], 64, 64, 4
        $region24: #{tpu_custom_call.1} parent=11 // pred_fallthru
          _
        // Predicated region
        $region25: #{tpu_custom_call.1} parent=11 // pred_check
          %p210 = pneg %p129
        $region26: #{tpu_custom_call.1} parent=11 // pred_check_branch
          %212 = sbr.rel (%p210) target = $region28
        $region27: #{tpu_custom_call.1} parent=11 // pred_region
          _
        $region28: #{tpu_custom_call.1} parent=11 // pred_fallthru
          _
      $region12: #{tpu_custom_call.1} parent=5 // pred_fallthru
        _
      %p213 = scmp.lt.s32.totalorder %s19, 2
      // Predicated region
      $region29: #{tpu_custom_call.1} parent=5 // pred_check
        %p214 = pneg %p213
      $region30: #{tpu_custom_call.1} parent=5 // pred_check_branch
        %216 = sbr.rel (%p214) target = $region32
      $region31: #{tpu_custom_call.1} parent=5 // pred_region
        // Predicated region
        $region33: #{tpu_custom_call.1} parent=31 // pred_check
          %p217 = pneg %p39
        $region34: #{tpu_custom_call.1} parent=31 // pred_check_branch
          %219 = sbr.rel (%p217) target = $region36
        $region35: #{tpu_custom_call.1} parent=31 // pred_region
          %s220 = sand.u32 %s29, 1
          %s221 = scalar_lea.sflag [#allocation4], %s220
          %s222 = sand.u32 %s29, 1
          %s223 = smul.addr %s222, 8
          %s224 = scalar_lea.vmem [#allocation3], %s223
          %226 = vsyncadd %s221, 0
          %s227 = smul.addr %s19, 8
          %s228 = scalar_lea.hbm %s0, %s227
          %s230 = sshll.u32 %s228, 4
          %s231 = int_to_ptr.hbm [resolvable:$true] %s230
          %s232 = sshll.u32 %s224, 4
          %s233 = int_to_ptr.vmem [resolvable:$true] %s232
          %235 = dma.hbm_to_vmem [thread:$0]  %s231, 128, %s233, %s221
        $region36: #{tpu_custom_call.1} parent=31 // pred_fallthru
          _
      $region32: #{tpu_custom_call.1} parent=5 // pred_fallthru
        _
      %p236 = scmp.le.s32.totalorder 1, %s19
      %p237 = scmp.lt.s32.totalorder %s19, 3
      %p238 = pnand %p236, %p237
      %p239 = pneg %p238
      // Predicated region
      $region37: #{tpu_custom_call.1} parent=5 // pred_check
        _
      $region38: #{tpu_custom_call.1} parent=5 // pred_check_branch
        %241 = sbr.rel (%p238) target = $region40
      $region39: #{tpu_custom_call.1} parent=5 // pred_region
        %s242 = ssub.s32 %s19, 1
        %s243 = sand.u32 %s32, 1
        %s244 = scalar_lea.sflag [#allocation4], %s243
        %s245 = sand.u32 %s32, 1
        %s246 = smul.addr %s245, 8
        %s247 = scalar_lea.vmem [#allocation3], %s246
        // Predicated region
        $region41: #{tpu_custom_call.1} parent=39 // pred_check
          %p248 = pneg %p45
        $region42: #{tpu_custom_call.1} parent=39 // pred_check_branch
          %250 = sbr.rel (%p248) target = $region44
        $region43: #{tpu_custom_call.1} parent=39 // pred_region
          %252 = dma.done %s244, 128
        $region44: #{tpu_custom_call.1} parent=39 // pred_fallthru
          _
        // Predicated region
        $region45: #{tpu_custom_call.1} parent=39 // pred_check
          %p253 = pneg %p66
        $region46: #{tpu_custom_call.1} parent=39 // pred_check_branch
          %255 = sbr.rel (%p253) target = $region48
        $region47: #{tpu_custom_call.1} parent=39 // pred_region
          %257 = dma.done [#allocation7], 1024
        $region48: #{tpu_custom_call.1} parent=39 // pred_fallthru
          _
        // Predicated region
        $region49: #{tpu_custom_call.1} parent=39 // pred_check
          %p258 = pneg %p87
        $region50: #{tpu_custom_call.1} parent=39 // pred_check_branch
          %260 = sbr.rel (%p258) target = $region52
        $region51: #{tpu_custom_call.1} parent=39 // pred_region
          %262 = dma.done [#allocation7], 32
        $region52: #{tpu_custom_call.1} parent=39 // pred_fallthru
          _
        // Predicated region
        $region53: #{tpu_custom_call.1} parent=39 // pred_check
          %p263 = pneg %p108
        $region54: #{tpu_custom_call.1} parent=39 // pred_check_branch
          %265 = sbr.rel (%p263) target = $region56
        $region55: #{tpu_custom_call.1} parent=39 // pred_region
          %267 = dma.done [#allocation10], 512
        $region56: #{tpu_custom_call.1} parent=39 // pred_fallthru
          _
        %s268 = sand.u32 %s32, 1
        %s269 = scalar_lea.sflag [#allocation4], %s268
        %s270 = sand.u32 %s32, 1
        %s271 = smul.addr %s270, 8
        %s272 = scalar_lea.vmem [#allocation3], %s271
        %p273 = pneg %p45
        %p274 = pneg %p42
        %p275 = pneg %p66
        %p276 = pneg %p63
        %p277 = pneg %p87
        %p278 = pneg %p84
        %p279 = pneg %p108
        %p280 = pneg %p105
        %p281 = pneg %p129
        %p282 = pneg %p126
        %p283 = pneg %p155
        %p284 = pneg %p152
        %s285 = sand.u32 %s142, 1
        %s286 = scalar_lea.sflag [#allocation5], %s285
        %s287 = sand.u32 %s142, 1
        %s288 = smul.addr %s287, 8
        %s289 = scalar_lea.vmem [#allocation11], %s288
        %v291 = vld [vmem:[%s247] sm:$0xff]
        %v292 = vpack.c.bf16 %v291, %v291
        %v293 = vld [vmem:[#allocation6] sm:$0xff]
        %v294 = vld [vmem:[#allocation6 + $0x8] sm:$0xff]
        %v295 = vld [vmem:[#allocation6 + $0x10] sm:$0xff]
        %v296 = vld [vmem:[#allocation6 + $0x18] sm:$0xff]
        %v297 = vld [vmem:[#allocation6 + $0x20] sm:$0xff]
        %v298 = vld [vmem:[#allocation6 + $0x28] sm:$0xff]
        %v299 = vld [vmem:[#allocation6 + $0x30] sm:$0xff]
        %v300 = vld [vmem:[#allocation6 + $0x38] sm:$0xff]
        %v301 = vld [vmem:[#allocation8] sm:$0x3]
        %v303 = vperm.slane %v301, 0
        %v304 = vperm.slane %v301, 1
        %v315 = vunpack.c.l.b16 %v293
        %v316 = vunpack.c.h.b16 %v293
        %v317 = vunpack.c.l.b16 %v294
        %v318 = vunpack.c.h.b16 %v294
        %v319 = vunpack.c.l.b16 %v295
        %v320 = vunpack.c.h.b16 %v295
        %v321 = vunpack.c.l.b16 %v296
        %v322 = vunpack.c.h.b16 %v296
        %v323 = vunpack.c.l.b16 %v297
        %v324 = vunpack.c.h.b16 %v297
        %v325 = vunpack.c.l.b16 %v298
        %v326 = vunpack.c.h.b16 %v298
        %v327 = vunpack.c.l.b16 %v299
        %v328 = vunpack.c.h.b16 %v299
        %v329 = vunpack.c.l.b16 %v300
        %v330 = vunpack.c.h.b16 %v300
        %v331 = vpack.c.b16 %v317, %v315
        %v332 = vpack.c.b16 %v318, %v316
        %v333 = vpack.c.b16 %v321, %v319
        %v334 = vpack.c.b16 %v322, %v320
        %v335 = vpack.c.b16 %v325, %v323
        %v336 = vpack.c.b16 %v326, %v324
        %v337 = vpack.c.b16 %v329, %v327
        %v338 = vpack.c.b16 %v330, %v328
        %vm347 = vcmask 523264
        %v349 = vsel %vm347, %v292, 0
        %351 = vmatpush.bf16.msra.mxu0 0
        %352 = vmatpush.bf16.msra.mxu0 0
        %353 = vmatpush.bf16.msra.mxu0 0
        %354 = vmatpush.bf16.msra.mxu0 0
        %355 = vmatpush.bf16.msra.mxu0 %v337
        %356 = vmatpush.bf16.msra.mxu0 %v335
        %357 = vmatpush.bf16.msra.mxu0 %v333
        %358 = vmatpush.bf16.msra.mxu0 %v331
        %359 = vmatmul.bf16.gmra.mxu0 %v349
        %v360 = vpop.f32.mrf.mxu0
        %v361 = vadd.f32 %v303, %v360
        %v362 = vpop.f32.mrf.mxu0
        %363 = vdwg.mxu0
        %364 = vmatpush.bf16.msra.mxu0 0
        %365 = vmatpush.bf16.msra.mxu0 0
        %366 = vmatpush.bf16.msra.mxu0 0
        %367 = vmatpush.bf16.msra.mxu0 0
        %368 = vmatpush.bf16.msra.mxu0 %v338
        %369 = vmatpush.bf16.msra.mxu0 %v336
        %370 = vmatpush.bf16.msra.mxu0 %v334
        %371 = vmatpush.bf16.msra.mxu0 %v332
        %372 = vmatmul.bf16.gmra.mxu0 %v349
        %v373 = vpop.f32.mrf.mxu0
        %v374 = vadd.f32 %v304, %v373
        %v375 = vpop.f32.mrf.mxu0
        %376 = vdwg.mxu0
        %v377 = vpack.c.bf16 %v374, %v361
        %v379 = vunpack.c.l.b16 %v377
        %v380 = vpack.c.b16 %v379, %v379
        %381 = vrot.lane.b32.xlu0 %v380, 64
        %v382 = vpop.permute.xlu0 %381
        %vm383 = vcmask 261120
        %v385 = vsel %vm383, %v377, 0
        %v388 = vsel %vm383, %v382, 0
        %390 = vmatpush.bf16.xpose.msra.mxu0 0
        %391 = vmatpush.bf16.xpose.msra.mxu0 0
        %392 = vmatpush.bf16.xpose.msra.mxu0 0
        %393 = vmatpush.bf16.xpose.msra.mxu0 0
        %394 = vmatpush.bf16.xpose.msra.mxu0 0
        %395 = vmatpush.bf16.xpose.msra.mxu0 0
        %396 = vmatpush.bf16.xpose.msra.mxu0 0
        %397 = vmatpush.bf16.xpose.msra.mxu0 %v388
        %398 = vmatmul.bf16.gmra.mxu0 %v385
        %v399 = vpop.f32.mrf.mxu0
        %v400 = vadd.f32 0.0, %v399
        %v401 = vpop.f32.mrf.mxu0
        %402 = vdwg.mxu0
        %vm403 = vcmask 64512
        %v404 = vsel %vm403, %v400, -inf
        %405 = vmax.xlane.f32.xlu0 %v404
        %v406 = vpop.xlane.xlu0 %405
        %v407 = vsub.f32 %v400, %v406
        %v408 = vmul.f32 %v407, 1.442695
        %v409 = vpow.pop %v408
        %v410 = vsel %vm403, %v409, 0.0
        %411 = vadd.xlane.f32.xlu0 %v410
        %v412 = vpop.xlane.xlu0 %411
        %v413 = vpack.c.bf16 %v409, %v409
        %v414 = vunpack.c.h.b16 %v377
        %v415 = vpack.c.b16 %v414, %v414
        %v417 = vsel %vm403, %v413, 0
        %vm419 = vcmask 1043456
        %v421 = vsel %vm419, %v415, 0
        %423 = vmatpush.bf16.msra.mxu0 0
        %424 = vmatpush.bf16.msra.mxu0 0
        %425 = vmatpush.bf16.msra.mxu0 0
        %426 = vmatpush.bf16.msra.mxu0 0
        %427 = vmatpush.bf16.msra.mxu0 0
        %428 = vmatpush.bf16.msra.mxu0 0
        %429 = vmatpush.bf16.msra.mxu0 0
        %430 = vmatpush.bf16.msra.mxu0 %v421
        %431 = vmatmul.bf16.gmra.mxu0 %v417
        %v432 = vpop.f32.mrf.mxu0
        %v433 = vadd.f32 0.0, %v432
        %v434 = vpop.f32.mrf.mxu0
        %435 = vdwg.mxu0
        %v436 = vrcp.pop %v412
        %v437 = vmul.f32 %v433, %v436
        %v438 = vpack.c.bf16 %v437, %v437
        %vm439 = vcmask 257024
        %440 = vst.msk [vmem:[#allocation2] sm:$0xf] %vm439, %v438
        %441 = vrot.lane.b32.xlu0 %v380, 96
        %v442 = vpop.permute.xlu0 %441
        %443 = vrot.lane.b32.xlu0 %v380, 32
        %v444 = vpop.permute.xlu0 %443
        %vm445 = vcmask 130048
        %v447 = vsel %vm445, %v442, 0
        %v450 = vsel %vm445, %v444, 0
        %452 = vmatpush.bf16.xpose.msra.mxu0 0
        %453 = vmatpush.bf16.xpose.msra.mxu0 0
        %454 = vmatpush.bf16.xpose.msra.mxu0 0
        %455 = vmatpush.bf16.xpose.msra.mxu0 0
        %456 = vmatpush.bf16.xpose.msra.mxu0 0
        %457 = vmatpush.bf16.xpose.msra.mxu0 0
        %458 = vmatpush.bf16.xpose.msra.mxu0 0
        %459 = vmatpush.bf16.xpose.msra.mxu0 %v450
        %460 = vmatmul.bf16.gmra.mxu0 %v447
        %v461 = vpop.f32.mrf.mxu0
        %v462 = vadd.f32 0.0, %v461
        %v463 = vpop.f32.mrf.mxu0
        %464 = vdwg.mxu0
        %v465 = vsel %vm403, %v462, -inf
        %466 = vmax.xlane.f32.xlu0 %v465
        %v467 = vpop.xlane.xlu0 %466
        %v468 = vsub.f32 %v462, %v467
        %v469 = vmul.f32 %v468, 1.442695
        %v470 = vpow.pop %v469
        %v471 = vsel %vm403, %v470, 0.0
        %472 = vadd.xlane.f32.xlu0 %v471
        %v473 = vpop.xlane.xlu0 %472
        %v474 = vpack.c.bf16 %v470, %v470
        %475 = vrot.lane.b32.xlu0 %v415, 96
        %v476 = vpop.permute.xlu0 %475
        %v478 = vsel %vm403, %v474, 0
        %v481 = vsel %vm419, %v476, 0
        %483 = vmatpush.bf16.msra.mxu0 0
        %484 = vmatpush.bf16.msra.mxu0 0
        %485 = vmatpush.bf16.msra.mxu0 0
        %486 = vmatpush.bf16.msra.mxu0 0
        %487 = vmatpush.bf16.msra.mxu0 0
        %488 = vmatpush.bf16.msra.mxu0 0
        %489 = vmatpush.bf16.msra.mxu0 0
        %490 = vmatpush.bf16.msra.mxu0 %v481
        %491 = vmatmul.bf16.gmra.mxu0 %v478
        %v492 = vpop.f32.mrf.mxu0
        %v493 = vadd.f32 0.0, %v492
        %v494 = vpop.f32.mrf.mxu0
        %495 = vdwg.mxu0
        %v496 = vrcp.pop %v473
        %v497 = vmul.f32 %v493, %v496
        %v498 = vpack.c.bf16 %v497, %v497
        %500 = vrot.lane.b32.xlu0 %v498, 32
        %v501 = vpop.permute.xlu0 %500
        %vm503 = vcmask 388352
        %504 = vst.msk [vmem:[#allocation2] sm:$0xf] %vm503, %v501
        %505 = vrot.lane.b32.xlu0 %v380, 80
        %v506 = vpop.permute.xlu0 %505
        %507 = vrot.lane.b32.xlu0 %v380, 16
        %v508 = vpop.permute.xlu0 %507
        %v510 = vsel %vm403, %v506, 0
        %v513 = vsel %vm403, %v508, 0
        %515 = vmatpush.bf16.xpose.msra.mxu0 0
        %516 = vmatpush.bf16.xpose.msra.mxu0 0
        %517 = vmatpush.bf16.xpose.msra.mxu0 0
        %518 = vmatpush.bf16.xpose.msra.mxu0 0
        %519 = vmatpush.bf16.xpose.msra.mxu0 0
        %520 = vmatpush.bf16.xpose.msra.mxu0 0
        %521 = vmatpush.bf16.xpose.msra.mxu0 0
        %522 = vmatpush.bf16.xpose.msra.mxu0 %v513
        %523 = vmatmul.bf16.gmra.mxu0 %v510
        %v524 = vpop.f32.mrf.mxu0
        %v525 = vadd.f32 0.0, %v524
        %v526 = vpop.f32.mrf.mxu0
        %527 = vdwg.mxu0
        %v528 = vsel %vm403, %v525, -inf
        %529 = vmax.xlane.f32.xlu0 %v528
        %v530 = vpop.xlane.xlu0 %529
        %v531 = vsub.f32 %v525, %v530
        %v532 = vmul.f32 %v531, 1.442695
        %v533 = vpow.pop %v532
        %v534 = vsel %vm403, %v533, 0.0
        %535 = vadd.xlane.f32.xlu0 %v534
        %v536 = vpop.xlane.xlu0 %535
        %v537 = vpack.c.bf16 %v533, %v533
        %538 = vrot.lane.b32.xlu0 %v415, 80
        %v539 = vpop.permute.xlu0 %538
        %v541 = vsel %vm403, %v537, 0
        %v544 = vsel %vm419, %v539, 0
        %546 = vmatpush.bf16.msra.mxu0 0
        %547 = vmatpush.bf16.msra.mxu0 0
        %548 = vmatpush.bf16.msra.mxu0 0
        %549 = vmatpush.bf16.msra.mxu0 0
        %550 = vmatpush.bf16.msra.mxu0 0
        %551 = vmatpush.bf16.msra.mxu0 0
        %552 = vmatpush.bf16.msra.mxu0 0
        %553 = vmatpush.bf16.msra.mxu0 %v544
        %554 = vmatmul.bf16.gmra.mxu0 %v541
        %v555 = vpop.f32.mrf.mxu0
        %v556 = vadd.f32 0.0, %v555
        %v557 = vpop.f32.mrf.mxu0
        %558 = vdwg.mxu0
        %v559 = vrcp.pop %v536
        %v560 = vmul.f32 %v556, %v559
        %v561 = vpack.c.bf16 %v560, %v560
        %563 = vrot.lane.b32.xlu0 %v561, 48
        %v564 = vpop.permute.xlu0 %563
        %vm566 = vcmask 454016
        %567 = vst.msk [vmem:[#allocation2] sm:$0xf] %vm566, %v564
        %568 = vrot.lane.b32.xlu0 %v380, 72
        %v569 = vpop.permute.xlu0 %568
        %570 = vrot.lane.b32.xlu0 %v380, 8
        %v571 = vpop.permute.xlu0 %570
        %v573 = vsel %vm403, %v569, 0
        %v576 = vsel %vm403, %v571, 0
        %578 = vmatpush.bf16.xpose.msra.mxu0 0
        %579 = vmatpush.bf16.xpose.msra.mxu0 0
        %580 = vmatpush.bf16.xpose.msra.mxu0 0
        %581 = vmatpush.bf16.xpose.msra.mxu0 0
        %582 = vmatpush.bf16.xpose.msra.mxu0 0
        %583 = vmatpush.bf16.xpose.msra.mxu0 0
        %584 = vmatpush.bf16.xpose.msra.mxu0 0
        %585 = vmatpush.bf16.xpose.msra.mxu0 %v576
        %586 = vmatmul.bf16.gmra.mxu0 %v573
        %v587 = vpop.f32.mrf.mxu0
        %v588 = vadd.f32 0.0, %v587
        %v589 = vpop.f32.mrf.mxu0
        %590 = vdwg.mxu0
        %v591 = vsel %vm403, %v588, -inf
        %592 = vmax.xlane.f32.xlu0 %v591
        %v593 = vpop.xlane.xlu0 %592
        %v594 = vsub.f32 %v588, %v593
        %v595 = vmul.f32 %v594, 1.442695
        %v596 = vpow.pop %v595
        %v597 = vsel %vm403, %v596, 0.0
        %598 = vadd.xlane.f32.xlu0 %v597
        %v599 = vpop.xlane.xlu0 %598
        %v600 = vpack.c.bf16 %v596, %v596
        %601 = vrot.lane.b32.xlu0 %v415, 72
        %v602 = vpop.permute.xlu0 %601
        %v604 = vsel %vm403, %v600, 0
        %v607 = vsel %vm419, %v602, 0
        %609 = vmatpush.bf16.msra.mxu0 0
        %610 = vmatpush.bf16.msra.mxu0 0
        %611 = vmatpush.bf16.msra.mxu0 0
        %612 = vmatpush.bf16.msra.mxu0 0
        %613 = vmatpush.bf16.msra.mxu0 0
        %614 = vmatpush.bf16.msra.mxu0 0
        %615 = vmatpush.bf16.msra.mxu0 0
        %616 = vmatpush.bf16.msra.mxu0 %v607
        %617 = vmatmul.bf16.gmra.mxu0 %v604
        %v618 = vpop.f32.mrf.mxu0
        %v619 = vadd.f32 0.0, %v618
        %v620 = vpop.f32.mrf.mxu0
        %621 = vdwg.mxu0
        %v622 = vrcp.pop %v599
        %v623 = vmul.f32 %v619, %v622
        %v624 = vpack.c.bf16 %v623, %v623
        %626 = vrot.lane.b32.xlu0 %v624, 56
        %v627 = vpop.permute.xlu0 %626
        %vm629 = vcmask 519616
        %630 = vst.msk [vmem:[#allocation2] sm:$0xf] %vm629, %v627
        %v631 = vld [vmem:[#allocation2] sm:$0xf]
        %v632 = vld [vmem:[#allocation9] sm:$0xf]
        %v633 = vld [vmem:[#allocation9 + $0x4] sm:$0xf]
        %v634 = vld [vmem:[#allocation9 + $0x8] sm:$0xf]
        %v635 = vld [vmem:[#allocation9 + $0xc] sm:$0xf]
        %v636 = vld [vmem:[#allocation9 + $0x10] sm:$0xf]
        %v637 = vld [vmem:[#allocation9 + $0x14] sm:$0xf]
        %v638 = vld [vmem:[#allocation9 + $0x18] sm:$0xf]
        %v639 = vld [vmem:[#allocation9 + $0x1c] sm:$0xf]
        %v640 = vld [vmem:[%s4] sm:$0x1]
        %v642 = vperm.slane %v640, 0
        %v652 = vunpack.c.l.b16 %v632
        %v653 = vunpack.c.l.b16 %v633
        %v654 = vunpack.c.l.b16 %v634
        %v655 = vunpack.c.l.b16 %v635
        %v656 = vunpack.c.l.b16 %v636
        %v657 = vunpack.c.l.b16 %v637
        %v658 = vunpack.c.l.b16 %v638
        %v659 = vunpack.c.l.b16 %v639
        %v660 = vpack.c.b16 %v653, %v652
        %v661 = vpack.c.b16 %v655, %v654
        %v662 = vpack.c.b16 %v657, %v656
        %v663 = vpack.c.b16 %v659, %v658
        %v669 = vsel %vm347, %v631, 0
        %671 = vmatpush.bf16.msra.mxu0 0
        %672 = vmatpush.bf16.msra.mxu0 0
        %673 = vmatpush.bf16.msra.mxu0 0
        %674 = vmatpush.bf16.msra.mxu0 0
        %675 = vmatpush.bf16.msra.mxu0 %v663
        %676 = vmatpush.bf16.msra.mxu0 %v662
        %677 = vmatpush.bf16.msra.mxu0 %v661
        %678 = vmatpush.bf16.msra.mxu0 %v660
        %679 = vmatmul.bf16.gmra.mxu0 %v669
        %v680 = vpop.f32.mrf.mxu0
        %v681 = vadd.f32 %v642, %v680
        %v682 = vpop.f32.mrf.mxu0
        %683 = vdwg.mxu0
        %684 = vst.msk [vmem:[%s289] sm:$0xff] %vm347, %v681
        %s685 = sand.u32 %s142, 1
        %s686 = scalar_lea.sflag [#allocation5], %s685
        %s687 = sand.u32 %s142, 1
        %s688 = smul.addr %s687, 8
        %s689 = scalar_lea.vmem [#allocation11], %s688
        // Predicated region
        $region57: #{tpu_custom_call.1} parent=39 // pred_check
          %p690 = pneg %p152
        $region58: #{tpu_custom_call.1} parent=39 // pred_check_branch
          %692 = sbr.rel (%p690) target = $region60
        $region59: #{tpu_custom_call.1} parent=39 // pred_region
          %694 = vsyncadd %s686, 0
          %s695 = smul.addr %s24, 8
          %s696 = scalar_lea.hbm %s5, %s695
          %s698 = sshll.u32 %s689, 4
          %s699 = int_to_ptr.vmem [resolvable:$true] %s698
          %s700 = sshll.u32 %s696, 4
          %s701 = int_to_ptr.hbm [resolvable:$true] %s700
          %703 = dma.vmem_to_hbm [thread:$0]  %s699, 128, %s701, %s686
        $region60: #{tpu_custom_call.1} parent=39 // pred_fallthru
          _
      $region40: #{tpu_custom_call.1} parent=5 // pred_fallthru
        _
      %p704 = scmp.le.s32.totalorder 2, %s19
      // Predicated region
      $region61: #{tpu_custom_call.1} parent=5 // pred_check
        %p705 = pneg %p704
      $region62: #{tpu_custom_call.1} parent=5 // pred_check_branch
        %707 = sbr.rel (%p705) target = $region64
      $region63: #{tpu_custom_call.1} parent=5 // pred_region
        %s708 = ssub.s32 %s19, 2
        // Predicated region
        $region65: #{tpu_custom_call.1} parent=63 // pred_check
          %p709 = pneg %p158
        $region66: #{tpu_custom_call.1} parent=63 // pred_check_branch
          %711 = sbr.rel (%p709) target = $region68
        $region67: #{tpu_custom_call.1} parent=63 // pred_region
          %s712 = sand.u32 %s143, 1
          %s713 = scalar_lea.sflag [#allocation5], %s712
          %s714 = sand.u32 %s143, 1
          %s715 = smul.addr %s714, 8
          %s716 = scalar_lea.vmem [#allocation11], %s715
          %718 = dma.done %s713, 128
        $region68: #{tpu_custom_call.1} parent=63 // pred_fallthru
          _
      $region64: #{tpu_custom_call.1} parent=5 // pred_fallthru
        _
    $region6: #{tpu_custom_call.1} parent=1 // loop_footer
      %s23 = sadd.s32 1, %s19
    $region7: #{tpu_custom_call.1} parent=1 // loop_footer_branch
      %18 = sbr.rel target = $region3
    $region8: #{tpu_custom_call.1} parent=1 // loop_exit
      _
    %719 = vsyncpa [#allocation4], 1
    %s720 = scalar_lea.sflag [#allocation4], 1
    %721 = vsyncpa %s720, 1
    %722 = vsyncpa [#allocation7], 1
    %723 = vsyncpa [#allocation10], 1
    %724 = vsyncpa [#allocation5], 1
    %s725 = scalar_lea.sflag [#allocation5], 1
    %726 = vsyncpa %s725, 1

</llo_original>
